<compile_context>
chip_gen: v7x
topology: tpu7x:2x2x1
jax: 0.10.0
libtpu: 0.0.40
codegen_flags: <defaults>
</compile_context>

<pallas_src>
import jax
import jax.numpy as jnp
from jax.experimental import pallas as pl
from jax.experimental.pallas import tpu as pltpu


def _layernorm(x, gamma, beta, eps=1e-5):
    mu = jnp.mean(x, axis=-1, keepdims=True)
    var = jnp.mean((x - mu) ** 2, axis=-1, keepdims=True)
    return (x - mu) * jax.lax.rsqrt(var + eps) * gamma + beta


def _make_kernel(num_heads, weight_alpha):
    alpha = float(weight_alpha)

    def kernel(fv_ref, mask_ref, ew_ref, qp_ref, query_ref,
               wk_ref, bk_ref, wv_ref, bv_ref, wo_ref, bo_ref,
               g1_ref, be1_ref, w1_ref, bf1_ref, w2_ref, bf2_ref,
               g2_ref, be2_ref, out_ref):
        Bt, _, Lv = mask_ref.shape                      # mask block: (Bt, 1, Lv)
        C, D = qp_ref.shape
        hd = D // num_heads
        scale = 1.0 / float(hd) ** 0.5

        # ---- K/V projections: one big bf16 MXU matmul each, f32 accumulate --
        fv = fv_ref[...]                                # (Bt*Lv, D) bf16
        k = jnp.dot(fv, wk_ref[...],
                    preferred_element_type=jnp.float32) + bk_ref[...]
        v = jnp.dot(fv, wv_ref[...],
                    preferred_element_type=jnp.float32) + bv_ref[...]
        k3 = k.reshape(Bt, Lv, D).astype(jnp.bfloat16)  # leading-dim split: free
        v3 = v.reshape(Bt, Lv, D).astype(jnp.bfloat16)

        # q projection hoisted to the wrapper (batch-independent); scale once.
        qs = (qp_ref[...] * scale).astype(jnp.bfloat16)  # (C, D)
        wo = wo_ref[...]                                 # (D, D) bf16

        # ---- shared mask bias + renormalised external weights (f32) ---------
        # Kept at (Bt, 1, Lv); the broadcast over C happens implicitly below.
        maskv = mask_ref[...]                            # (Bt, 1, Lv) 1.0/0.0
        bias = jnp.where(maskv > 0.0, 0.0, -1e9)         # (Bt, 1, Lv) f32
        ewm = ew_ref[...] * maskv
        ew_b = (1.0 - alpha) * (
            ewm / (jnp.sum(ewm, axis=-1, keepdims=True) + 1e-9))

        # ---- per-head attention; out-proj contraction split per head so the
        # head contexts accumulate directly into attn_out (no lane-sparse
        # width-hd stores, no ctx scratch).
        # TODO(synk): switch to lax.fori_loop(..., unroll=True) with pl.ds
        # slices once num_heads >= 8.
        attn_out = jnp.zeros((Bt * C, D), jnp.float32)
        for h in range(num_heads):
            sl = slice(h * hd, (h + 1) * hd)
            qh = jnp.broadcast_to(qs[:, sl][None], (Bt, C, hd))      # small
            s = jnp.einsum('bcd,bld->bcl', qh, k3[:, :, sl],
                           preferred_element_type=jnp.float32) + bias
            s = s - jnp.max(s, axis=-1, keepdims=True)
            p = jnp.exp(s)
            attn = p * pl.reciprocal(jnp.sum(p, axis=-1, keepdims=True),
                                     approx=True)
            # TODO(synk): attn_dropout is identity in eval mode.
            comb = alpha * attn + ew_b
            comb = comb / (jnp.sum(comb, axis=-1, keepdims=True) + 1e-9)
            ctx = jnp.einsum('bcl,bld->bcd', comb.astype(jnp.bfloat16),
                             v3[:, :, sl],
                             preferred_element_type=jnp.float32)
            attn_out = attn_out + jnp.dot(
                ctx.reshape(Bt * C, hd).astype(jnp.bfloat16), wo[sl, :],
                preferred_element_type=jnp.float32)
        attn_out = attn_out + bo_ref[...]

        # ---- residual + LN + FFN + final LN (f32 math, bf16 MXU operands) ---
        x = attn_out.reshape(Bt, C, D) + query_ref[...]   # implicit Bt broadcast
        x1 = _layernorm(x, g1_ref[...], be1_ref[...]).reshape(Bt * C, D)
        ff = jnp.maximum(
            jnp.dot(x1.astype(jnp.bfloat16), w1_ref[...],
                    preferred_element_type=jnp.float32) + bf1_ref[...], 0.0)
        ff = jnp.dot(ff.astype(jnp.bfloat16), w2_ref[...],
                     preferred_element_type=jnp.float32) + bf2_ref[...]
        y = _layernorm(x1 + ff, g2_ref[...], be2_ref[...])
        out_ref[...] = y.reshape(Bt, C, D)

    return kernel


def _vmem_budget(Bt, Lv_pad, C, D):
    """Estimate the per-step VMEM working set (bytes), clamped to the chip."""
    f32, bf16 = 4, 2
    weights = (3 * D * D + 8 * D * D) * bf16 + (2 * C * D + 14 * D) * f32
    per_step = (2 * Bt * Lv_pad * D * bf16          # fv (double-buffered)
                + 2 * Bt * Lv_pad * D * (f32 + bf16)  # k, v (+ bf16 copies)
                + 4 * Bt * C * Lv_pad * f32         # scores/attn/comb temporaries
                + Bt * C * (5 * D + 4 * D) * f32    # attn_out/x1/ff/out
                + 4 * Bt * 8 * Lv_pad * f32)        # mask/ew blocks (sublane-padded)
    total = 2 * weights + 2 * per_step              # safety factor
    try:
        cap = int(pltpu.get_tpu_info().vmem_capacity_bytes * 0.8)
    except Exception:                               # conservative fallback
        cap = 100 * 1024 * 1024
    cap = max(cap, 32 * 1024 * 1024)
    return int(min(max(total, 32 * 1024 * 1024), cap))


def compressor_forward(Fv, extern_weight, mask, params, num_heads, weight_alpha,
                       batch_tile=None):
    """batch_tile: batches per grid step.  Default picks Bt so there are
    multiple grid steps (pipelining; both v7x TensorCores) while pushing
    Bt*C toward >=256 MXU rows when the batch is large enough."""
    B, Lv, D = Fv.shape
    C = params["query"].shape[0]

    # Lane-dense layout: pad Lv (the lane axis of scores/attn/mask) to a
    # multiple of 128; padded tokens are masked out so they never contribute.
    Lv_pad = ((Lv + 127) // 128) * 128

    if batch_tile is None:
        Bt = max(1, min(-(-256 // C), B // 4)) if B >= 4 else 1
    else:
        Bt = int(batch_tile)
    nb = -(-B // Bt)
    B_pad = nb * Bt

    f32, bf16 = jnp.float32, jnp.bfloat16
    if B_pad == B and Lv_pad == Lv:
        # Already aligned: skip the extra padded-copy HBM passes.
        fv_p = Fv.astype(bf16)
        mask_p = mask.astype(f32)
        ew_p = extern_weight.astype(f32)
    else:
        fv_p = jnp.zeros((B_pad, Lv_pad, D), bf16).at[:B, :Lv].set(Fv.astype(bf16))
        mask_p = jnp.zeros((B_pad, Lv_pad), f32).at[:B, :Lv].set(mask.astype(f32))
        ew_p = jnp.zeros((B_pad, Lv_pad), f32).at[:B, :Lv].set(
            extern_weight.astype(f32))

    fv2d = fv_p.reshape(B_pad * Lv_pad, D)
    # (Bt, 1, Lv_pad) blocks keep the last two block dims equal to the array
    # dims (Mosaic block-shape constraint); the C-broadcast happens in-kernel.
    mask3 = mask_p.reshape(B_pad, 1, Lv_pad)
    ew3 = ew_p.reshape(B_pad, 1, Lv_pad)

    # Hoisted: query projection is identical for every batch -> compute once.
    q_proj = (params["query"] @ params["wq"] + params["bq"]).astype(f32)  # (C, D)

    weight_args = [
        q_proj, params["query"].astype(f32),
        params["wk"].astype(bf16), params["bk"].reshape(1, D).astype(f32),
        params["wv"].astype(bf16), params["bv"].reshape(1, D).astype(f32),
        params["wo"].astype(bf16), params["bo"].reshape(1, D).astype(f32),
        params["g1"].reshape(1, D).astype(f32), params["be1"].reshape(1, D).astype(f32),
        params["w1"].astype(bf16), params["bf1"].reshape(1, 4 * D).astype(f32),
        params["w2"].astype(bf16), params["bf2"].reshape(1, D).astype(f32),
        params["g2"].reshape(1, D).astype(f32), params["be2"].reshape(1, D).astype(f32),
    ]

    def full_spec(shape):
        nd = len(shape)
        # TODO(synk): on v7x consider pipeline_mode=pl.Buffered(1) here so the
        # grid-invariant weights are single-buffered (halves resident VMEM).
        return pl.BlockSpec(tuple(shape), lambda b, _nd=nd: (0,) * _nd)

    in_specs = (
        [pl.BlockSpec((Bt * Lv_pad, D), lambda b: (b, 0)),
         pl.BlockSpec((Bt, 1, Lv_pad), lambda b: (b, 0, 0)),
         pl.BlockSpec((Bt, 1, Lv_pad), lambda b: (b, 0, 0))]
        + [full_spec(w.shape) for w in weight_args])

    out = pl.pallas_call(
        _make_kernel(num_heads, weight_alpha),
        out_shape=jax.ShapeDtypeStruct((B_pad, C, D), jnp.float32),
        grid=(nb,),
        in_specs=in_specs,
        out_specs=pl.BlockSpec((Bt, C, D), lambda b: (b, 0, 0)),
        compiler_params=pltpu.CompilerParams(
            dimension_semantics=("parallel",),
            vmem_limit_bytes=_vmem_budget(Bt, Lv_pad, C, D)),
    )(fv2d, mask3, ew3, *weight_args)

    out = out[:B]
    compress_mask = jnp.ones((B, C), dtype=jnp.bool_)
    return out, compress_mask


def init_params(key, D, C):
    ks = jax.random.split(key, 8)

    def lin(k, din, dout):
        kw, kb = jax.random.split(k)
        lim = (6.0 / (din + dout)) ** 0.5
        w = jax.random.uniform(kw, (din, dout), jnp.float32, -lim, lim)
        b = jax.random.uniform(kb, (dout,), jnp.float32, -0.05, 0.05)
        return w, b

    qlim = (6.0 / (C + D)) ** 0.5
    query = jax.random.uniform(ks[0], (C, D), jnp.float32, -qlim, qlim)
    wq, bq = lin(ks[1], D, D)
    wk, bk = lin(ks[2], D, D)
    wv, bv = lin(ks[3], D, D)
    wo, bo = lin(ks[4], D, D)
    w1, bf1 = lin(ks[5], D, 4 * D)
    w2, bf2 = lin(ks[6], 4 * D, D)
    return dict(
        query=query, wq=wq, bq=bq, wk=wk, bk=bk, wv=wv, bv=bv, wo=wo, bo=bo,
        g1=jnp.ones((D,), jnp.float32), be1=jnp.zeros((D,), jnp.float32),
        w1=w1, bf1=bf1, w2=w2, bf2=bf2,
        g2=jnp.ones((D,), jnp.float32), be2=jnp.zeros((D,), jnp.float32),
    )


def reference(Fv, extern_weight, mask, P, num_heads, alpha):
    """Pure-JAX f32 reference replicating the PyTorch forward (eval mode)."""
    B, Lv, D = Fv.shape
    C = P["query"].shape[0]
    hd = D // num_heads
    q = P["query"] @ P["wq"] + P["bq"]                                    # (C, D)
    k = jnp.einsum("bld,de->ble", Fv, P["wk"]) + P["bk"]
    v = jnp.einsum("bld,de->ble", Fv, P["wv"]) + P["bv"]
    qh = q.reshape(C, num_heads, hd).transpose(1, 0, 2)                   # (H, C, hd)
    kh = k.reshape(B, Lv, num_heads, hd).transpose(0, 2, 1, 3)            # (B, H, Lv, hd)
    vh = v.reshape(B, Lv, num_heads, hd).transpose(0, 2, 1, 3)
    scores = jnp.einsum("hcd,bhld->bhcl", qh, kh) / (hd ** 0.5)
    scores = jnp.where(mask[:, None, None, :], scores, -1e9)
    attn = jax.nn.softmax(scores, axis=-1)
    ewm = jnp.where(mask, extern_weight, 0.0)
    ewn = ewm / (jnp.sum(ewm, -1, keepdims=True) + 1e-9)
    comb = alpha * attn + (1.0 - alpha) * ewn[:, None, None, :]
    comb = comb / (jnp.sum(comb, -1, keepdims=True) + 1e-9)
    ctx = jnp.einsum("bhcl,bhld->bhcd", comb, vh)
    ctx = ctx.transpose(0, 2, 1, 3).reshape(B, C, D)
    attn_out = ctx @ P["wo"] + P["bo"]
    x1 = _layernorm(P["query"][None] + attn_out, P["g1"], P["be1"])
    ff = jax.nn.relu(x1 @ P["w1"] + P["bf1"]) @ P["w2"] + P["bf2"]
    return _layernorm(x1 + ff, P["g2"], P["be2"])


if __name__ == "__main__":
    B, Lv, D, C, H = 2, 16, 32, 8, 4
    alpha = 0.5
    key = jax.random.PRNGKey(0)
    kf, ke, kp = jax.random.split(key, 3)
    Fv = jax.random.normal(kf, (B, Lv, D), jnp.float32)
    extern_weight = jax.random.uniform(ke, (B, Lv), jnp.float32, 0.0, 1.0)
    lengths = jnp.array([Lv, Lv - 4])
    mask = jnp.arange(Lv)[None, :] < lengths[:, None]                     # (B, Lv) bool
    params = init_params(kp, D, C)

    Fv_compress, compress_mask = compressor_forward(
        Fv, extern_weight, mask, params, H, alpha)
    Fv_compress = jax.block_until_ready(Fv_compress)

    assert Fv_compress.shape == (B, C, D)
    assert compress_mask.shape == (B, C) and compress_mask.dtype == jnp.bool_

    ref = reference(Fv, extern_weight, mask, params, H, alpha)
    max_err = float(jnp.max(jnp.abs(Fv_compress - ref)))
    # 5e-2 tolerance: the kernel runs every matmul with bf16 operands (f32
    # accumulation) and uses pl.reciprocal(approx=True) for the softmax
    # denominator, vs. an exact-f32 reference.  Typical max-abs error is ~1e-2.
    assert max_err < 5e-2, f"max abs error vs reference: {max_err}"
    print("KERNEL_OK")
</pallas_src>

<mosaic_0001>
module attributes {stable_mosaic.version = 11 : i64} {
  func.func @kernel(%arg0: i32, %arg1: memref<128x32xbf16, #tpu.memory_space<vmem>>, %arg2: memref<1x1x128xf32, #tpu.memory_space<vmem>>, %arg3: memref<1x1x128xf32, #tpu.memory_space<vmem>>, %arg4: memref<8x32xf32, #tpu.memory_space<vmem>>, %arg5: memref<8x32xf32, #tpu.memory_space<vmem>>, %arg6: memref<32x32xbf16, #tpu.memory_space<vmem>>, %arg7: memref<1x32xf32, #tpu.memory_space<vmem>>, %arg8: memref<32x32xbf16, #tpu.memory_space<vmem>>, %arg9: memref<1x32xf32, #tpu.memory_space<vmem>>, %arg10: memref<32x32xbf16, #tpu.memory_space<vmem>>, %arg11: memref<1x32xf32, #tpu.memory_space<vmem>>, %arg12: memref<1x32xf32, #tpu.memory_space<vmem>>, %arg13: memref<1x32xf32, #tpu.memory_space<vmem>>, %arg14: memref<32x128xbf16, #tpu.memory_space<vmem>>, %arg15: memref<1x128xf32, #tpu.memory_space<vmem>>, %arg16: memref<128x32xbf16, #tpu.memory_space<vmem>>, %arg17: memref<1x32xf32, #tpu.memory_space<vmem>>, %arg18: memref<1x32xf32, #tpu.memory_space<vmem>>, %arg19: memref<1x32xf32, #tpu.memory_space<vmem>>, %arg20: memref<1x8x32xf32, #tpu.memory_space<vmem>>) attributes {dimension_semantics = [#tpu.dimension_semantics<parallel>], iteration_bounds = array<i64: 2>, scalar_prefetch = 0 : i64, scratch_operands = 0 : i64, tpu.core_type = #tpu.core_type<tc>, window_params = [{transform_indices = @transform_0, window_bounds = array<i64: 128, 32>}, {transform_indices = @transform_1, window_bounds = array<i64: 1, 1, 128>}, {transform_indices = @transform_2, window_bounds = array<i64: 1, 1, 128>}, {pipeline_mode = #tpu.pipeline_mode<synchronous>, transform_indices = @transform_3, window_bounds = array<i64: 8, 32>}, {pipeline_mode = #tpu.pipeline_mode<synchronous>, transform_indices = @transform_4, window_bounds = array<i64: 8, 32>}, {pipeline_mode = #tpu.pipeline_mode<synchronous>, transform_indices = @transform_5, window_bounds = array<i64: 32, 32>}, {pipeline_mode = #tpu.pipeline_mode<synchronous>, transform_indices = @transform_6, window_bounds = array<i64: 1, 32>}, {pipeline_mode = #tpu.pipeline_mode<synchronous>, transform_indices = @transform_7, window_bounds = array<i64: 32, 32>}, {pipeline_mode = #tpu.pipeline_mode<synchronous>, transform_indices = @transform_8, window_bounds = array<i64: 1, 32>}, {pipeline_mode = #tpu.pipeline_mode<synchronous>, transform_indices = @transform_9, window_bounds = array<i64: 32, 32>}, {pipeline_mode = #tpu.pipeline_mode<synchronous>, transform_indices = @transform_10, window_bounds = array<i64: 1, 32>}, {pipeline_mode = #tpu.pipeline_mode<synchronous>, transform_indices = @transform_11, window_bounds = array<i64: 1, 32>}, {pipeline_mode = #tpu.pipeline_mode<synchronous>, transform_indices = @transform_12, window_bounds = array<i64: 1, 32>}, {pipeline_mode = #tpu.pipeline_mode<synchronous>, transform_indices = @transform_13, window_bounds = array<i64: 32, 128>}, {pipeline_mode = #tpu.pipeline_mode<synchronous>, transform_indices = @transform_14, window_bounds = array<i64: 1, 128>}, {pipeline_mode = #tpu.pipeline_mode<synchronous>, transform_indices = @transform_15, window_bounds = array<i64: 128, 32>}, {pipeline_mode = #tpu.pipeline_mode<synchronous>, transform_indices = @transform_16, window_bounds = array<i64: 1, 32>}, {pipeline_mode = #tpu.pipeline_mode<synchronous>, transform_indices = @transform_17, window_bounds = array<i64: 1, 32>}, {pipeline_mode = #tpu.pipeline_mode<synchronous>, transform_indices = @transform_18, window_bounds = array<i64: 1, 32>}, {transform_indices = @transform_19, window_bounds = array<i64: 1, 8, 32>}]} {
    %c0 = arith.constant 0 : index
    %c0_0 = arith.constant 0 : index
    %0 = vector.load %arg1[%c0, %c0_0] : memref<128x32xbf16, #tpu.memory_space<vmem>>, vector<128x32xbf16>
    %c0_1 = arith.constant 0 : index
    %c0_2 = arith.constant 0 : index
    %1 = vector.load %arg6[%c0_1, %c0_2] : memref<32x32xbf16, #tpu.memory_space<vmem>>, vector<32x32xbf16>
    %cst = arith.constant dense<0.000000e+00> : vector<128x32xf32>
    %2 = tpu.matmul %0, %1, %cst {dimension_numbers = #tpu.dot_dimension_numbers<[1], [0], [0], [1], [0, 0, 1, 1], [], []>} : vector<128x32xbf16>, vector<32x32xbf16>, vector<128x32xf32> -> vector<128x32xf32>
    %c0_3 = arith.constant 0 : index
    %c0_4 = arith.constant 0 : index
    %3 = vector.load %arg7[%c0_3, %c0_4] : memref<1x32xf32, #tpu.memory_space<vmem>>, vector<1x32xf32>
    %4 = vector.broadcast %3 : vector<1x32xf32> to vector<128x32xf32>
    %5 = arith.addf %2, %4 : vector<128x32xf32>
    %c0_5 = arith.constant 0 : index
    %c0_6 = arith.constant 0 : index
    %6 = vector.load %arg8[%c0_5, %c0_6] : memref<32x32xbf16, #tpu.memory_space<vmem>>, vector<32x32xbf16>
    %cst_7 = arith.constant dense<0.000000e+00> : vector<128x32xf32>
    %7 = tpu.matmul %0, %6, %cst_7 {dimension_numbers = #tpu.dot_dimension_numbers<[1], [0], [0], [1], [0, 0, 1, 1], [], []>} : vector<128x32xbf16>, vector<32x32xbf16>, vector<128x32xf32> -> vector<128x32xf32>
    %c0_8 = arith.constant 0 : index
    %c0_9 = arith.constant 0 : index
    %8 = vector.load %arg9[%c0_8, %c0_9] : memref<1x32xf32, #tpu.memory_space<vmem>>, vector<1x32xf32>
    %9 = vector.broadcast %8 : vector<1x32xf32> to vector<128x32xf32>
    %10 = arith.addf %7, %9 : vector<128x32xf32>
    %11 = vector.shape_cast %5 : vector<128x32xf32> to vector<1x128x32xf32>
    %12 = arith.truncf %11 : vector<1x128x32xf32> to vector<1x128x32xbf16>
    %13 = vector.shape_cast %10 : vector<128x32xf32> to vector<1x128x32xf32>
    %14 = arith.truncf %13 : vector<1x128x32xf32> to vector<1x128x32xbf16>
    %c0_10 = arith.constant 0 : index
    %c0_11 = arith.constant 0 : index
    %15 = vector.load %arg4[%c0_10, %c0_11] : memref<8x32xf32, #tpu.memory_space<vmem>>, vector<8x32xf32>
    %cst_12 = arith.constant 0.353553385 : f32
    %16 = vector.broadcast %cst_12 : f32 to vector<8x32xf32>
    %17 = arith.mulf %15, %16 : vector<8x32xf32>
    %18 = arith.truncf %17 : vector<8x32xf32> to vector<8x32xbf16>
    %c0_13 = arith.constant 0 : index
    %c0_14 = arith.constant 0 : index
    %19 = vector.load %arg10[%c0_13, %c0_14] : memref<32x32xbf16, #tpu.memory_space<vmem>>, vector<32x32xbf16>
    %c0_15 = arith.constant 0 : index
    %c0_16 = arith.constant 0 : index
    %c0_17 = arith.constant 0 : index
    %20 = vector.load %arg2[%c0_15, %c0_16, %c0_17] : memref<1x1x128xf32, #tpu.memory_space<vmem>>, vector<1x1x128xf32>
    %cst_18 = arith.constant 0.000000e+00 : f32
    %21 = vector.broadcast %cst_18 : f32 to vector<1x1x128xf32>
    %22 = arith.cmpf ogt, %20, %21 : vector<1x1x128xf32>
    %cst_19 = arith.constant 0.000000e+00 : f32
    %cst_20 = arith.constant -1.000000e+09 : f32
    %23 = vector.broadcast %cst_19 : f32 to vector<1x1x128xf32>
    %24 = vector.broadcast %cst_20 : f32 to vector<1x1x128xf32>
    %25 = arith.select %22, %23, %24 : vector<1x1x128xi1>, vector<1x1x128xf32>
    %c0_21 = arith.constant 0 : index
    %c0_22 = arith.constant 0 : index
    %c0_23 = arith.constant 0 : index
    %26 = vector.load %arg3[%c0_21, %c0_22, %c0_23] : memref<1x1x128xf32, #tpu.memory_space<vmem>>, vector<1x1x128xf32>
    %27 = arith.mulf %26, %20 : vector<1x1x128xf32>
    %cst_24 = arith.constant dense<0.000000e+00> : vector<1x1xf32>
    %28 = vector.multi_reduction <add>, %27, %cst_24 [2] : vector<1x1x128xf32> to vector<1x1xf32>
    %29 = vector.shape_cast %28 : vector<1x1xf32> to vector<1x1x1xf32>
    %cst_25 = arith.constant 9.99999971E-10 : f32
    %30 = vector.broadcast %cst_25 : f32 to vector<1x1x1xf32>
    %31 = arith.addf %29, %30 : vector<1x1x1xf32>
    %32 = vector.broadcast %31 : vector<1x1x1xf32> to vector<1x1x128xf32>
    %33 = arith.divf %27, %32 : vector<1x1x128xf32>
    %cst_26 = arith.constant 5.000000e-01 : f32
    %34 = vector.broadcast %cst_26 : f32 to vector<1x1x128xf32>
    %35 = arith.mulf %34, %33 : vector<1x1x128xf32>
    %cst_27 = arith.constant 0.000000e+00 : f32
    %36 = vector.broadcast %cst_27 : f32 to vector<8x32xf32>
    %37 = vector.extract_strided_slice %18 {offsets = [0, 0], sizes = [8, 8], strides = [1, 1]} : vector<8x32xbf16> to vector<8x8xbf16>
    %38 = vector.shape_cast %37 : vector<8x8xbf16> to vector<1x8x8xbf16>
    %39 = vector.extract_strided_slice %12 {offsets = [0, 0, 0], sizes = [1, 128, 8], strides = [1, 1, 1]} : vector<1x128x32xbf16> to vector<1x128x8xbf16>
    "tpu.trace_start"() <{level = 10 : i32, message = "bcd,bld->bcl"}> : () -> ()
    %cst_28 = arith.constant dense<0.000000e+00> : vector<1x8x128xf32>
    %40 = tpu.matmul %38, %39, %cst_28 {dimension_numbers = #tpu.dot_dimension_numbers<[2], [2], [1], [1], [0, 0, 0, 1, 1, 1], [0], [0]>} : vector<1x8x8xbf16>, vector<1x128x8xbf16>, vector<1x8x128xf32> -> vector<1x8x128xf32>
    "tpu.trace_stop"() : () -> ()
    %41 = vector.broadcast %25 : vector<1x1x128xf32> to vector<1x8x128xf32>
    %42 = arith.addf %40, %41 : vector<1x8x128xf32>
    %cst_29 = arith.constant dense<0xFF800000> : vector<1x8xf32>
    %43 = vector.multi_reduction <maximumf>, %42, %cst_29 [2] : vector<1x8x128xf32> to vector<1x8xf32>
    %44 = vector.shape_cast %43 : vector<1x8xf32> to vector<1x8x1xf32>
    %45 = vector.broadcast %44 : vector<1x8x1xf32> to vector<1x8x128xf32>
    %46 = arith.subf %42, %45 : vector<1x8x128xf32>
    %47 = math.exp %46 : vector<1x8x128xf32>
    %cst_30 = arith.constant dense<0.000000e+00> : vector<1x8xf32>
    %48 = vector.multi_reduction <add>, %47, %cst_30 [2] : vector<1x8x128xf32> to vector<1x8xf32>
    %49 = vector.shape_cast %48 : vector<1x8xf32> to vector<1x8x1xf32>
    %50 = tpu.reciprocal %49 {approx = true} : vector<1x8x1xf32> -> vector<1x8x1xf32>
    %51 = vector.broadcast %50 : vector<1x8x1xf32> to vector<1x8x128xf32>
    %52 = arith.mulf %47, %51 : vector<1x8x128xf32>
    %cst_31 = arith.constant 5.000000e-01 : f32
    %53 = vector.broadcast %cst_31 : f32 to vector<1x8x128xf32>
    %54 = arith.mulf %53, %52 : vector<1x8x128xf32>
    %55 = vector.broadcast %35 : vector<1x1x128xf32> to vector<1x8x128xf32>
    %56 = arith.addf %54, %55 : vector<1x8x128xf32>
    %cst_32 = arith.constant dense<0.000000e+00> : vector<1x8xf32>
    %57 = vector.multi_reduction <add>, %56, %cst_32 [2] : vector<1x8x128xf32> to vector<1x8xf32>
    %58 = vector.shape_cast %57 : vector<1x8xf32> to vector<1x8x1xf32>
    %cst_33 = arith.constant 9.99999971E-10 : f32
    %59 = vector.broadcast %cst_33 : f32 to vector<1x8x1xf32>
    %60 = arith.addf %58, %59 : vector<1x8x1xf32>
    %61 = vector.broadcast %60 : vector<1x8x1xf32> to vector<1x8x128xf32>
    %62 = arith.divf %56, %61 : vector<1x8x128xf32>
    %63 = arith.truncf %62 : vector<1x8x128xf32> to vector<1x8x128xbf16>
    %64 = vector.extract_strided_slice %14 {offsets = [0, 0, 0], sizes = [1, 128, 8], strides = [1, 1, 1]} : vector<1x128x32xbf16> to vector<1x128x8xbf16>
    "tpu.trace_start"() <{level = 10 : i32, message = "bcl,bld->bcd"}> : () -> ()
    %cst_34 = arith.constant dense<0.000000e+00> : vector<1x8x8xf32>
    %65 = tpu.matmul %63, %64, %cst_34 {dimension_numbers = #tpu.dot_dimension_numbers<[2], [1], [1], [2], [0, 0, 0, 1, 1, 2], [0], [0]>} : vector<1x8x128xbf16>, vector<1x128x8xbf16>, vector<1x8x8xf32> -> vector<1x8x8xf32>
    "tpu.trace_stop"() : () -> ()
    %66 = vector.shape_cast %65 : vector<1x8x8xf32> to vector<8x8xf32>
    %67 = arith.truncf %66 : vector<8x8xf32> to vector<8x8xbf16>
    %68 = vector.extract_strided_slice %19 {offsets = [0, 0], sizes = [8, 32], strides = [1, 1]} : vector<32x32xbf16> to vector<8x32xbf16>
    %cst_35 = arith.constant dense<0.000000e+00> : vector<8x32xf32>
    %69 = tpu.matmul %67, %68, %cst_35 {dimension_numbers = #tpu.dot_dimension_numbers<[1], [0], [0], [1], [0, 0, 1, 1], [], []>} : vector<8x8xbf16>, vector<8x32xbf16>, vector<8x32xf32> -> vector<8x32xf32>
    %70 = arith.addf %36, %69 : vector<8x32xf32>
    %71 = vector.extract_strided_slice %18 {offsets = [0, 8], sizes = [8, 8], strides = [1, 1]} : vector<8x32xbf16> to vector<8x8xbf16>
    %72 = vector.shape_cast %71 : vector<8x8xbf16> to vector<1x8x8xbf16>
    %73 = vector.extract_strided_slice %12 {offsets = [0, 0, 8], sizes = [1, 128, 8], strides = [1, 1, 1]} : vector<1x128x32xbf16> to vector<1x128x8xbf16>
    "tpu.trace_start"() <{level = 10 : i32, message = "bcd,bld->bcl"}> : () -> ()
    %cst_36 = arith.constant dense<0.000000e+00> : vector<1x8x128xf32>
    %74 = tpu.matmul %72, %73, %cst_36 {dimension_numbers = #tpu.dot_dimension_numbers<[2], [2], [1], [1], [0, 0, 0, 1, 1, 1], [0], [0]>} : vector<1x8x8xbf16>, vector<1x128x8xbf16>, vector<1x8x128xf32> -> vector<1x8x128xf32>
    "tpu.trace_stop"() : () -> ()
    %75 = vector.broadcast %25 : vector<1x1x128xf32> to vector<1x8x128xf32>
    %76 = arith.addf %74, %75 : vector<1x8x128xf32>
    %cst_37 = arith.constant dense<0xFF800000> : vector<1x8xf32>
    %77 = vector.multi_reduction <maximumf>, %76, %cst_37 [2] : vector<1x8x128xf32> to vector<1x8xf32>
    %78 = vector.shape_cast %77 : vector<1x8xf32> to vector<1x8x1xf32>
    %79 = vector.broadcast %78 : vector<1x8x1xf32> to vector<1x8x128xf32>
    %80 = arith.subf %76, %79 : vector<1x8x128xf32>
    %81 = math.exp %80 : vector<1x8x128xf32>
    %cst_38 = arith.constant dense<0.000000e+00> : vector<1x8xf32>
    %82 = vector.multi_reduction <add>, %81, %cst_38 [2] : vector<1x8x128xf32> to vector<1x8xf32>
    %83 = vector.shape_cast %82 : vector<1x8xf32> to vector<1x8x1xf32>
    %84 = tpu.reciprocal %83 {approx = true} : vector<1x8x1xf32> -> vector<1x8x1xf32>
    %85 = vector.broadcast %84 : vector<1x8x1xf32> to vector<1x8x128xf32>
    %86 = arith.mulf %81, %85 : vector<1x8x128xf32>
    %cst_39 = arith.constant 5.000000e-01 : f32
    %87 = vector.broadcast %cst_39 : f32 to vector<1x8x128xf32>
    %88 = arith.mulf %87, %86 : vector<1x8x128xf32>
    %89 = vector.broadcast %35 : vector<1x1x128xf32> to vector<1x8x128xf32>
    %90 = arith.addf %88, %89 : vector<1x8x128xf32>
    %cst_40 = arith.constant dense<0.000000e+00> : vector<1x8xf32>
    %91 = vector.multi_reduction <add>, %90, %cst_40 [2] : vector<1x8x128xf32> to vector<1x8xf32>
    %92 = vector.shape_cast %91 : vector<1x8xf32> to vector<1x8x1xf32>
    %cst_41 = arith.constant 9.99999971E-10 : f32
    %93 = vector.broadcast %cst_41 : f32 to vector<1x8x1xf32>
    %94 = arith.addf %92, %93 : vector<1x8x1xf32>
    %95 = vector.broadcast %94 : vector<1x8x1xf32> to vector<1x8x128xf32>
    %96 = arith.divf %90, %95 : vector<1x8x128xf32>
    %97 = arith.truncf %96 : vector<1x8x128xf32> to vector<1x8x128xbf16>
    %98 = vector.extract_strided_slice %14 {offsets = [0, 0, 8], sizes = [1, 128, 8], strides = [1, 1, 1]} : vector<1x128x32xbf16> to vector<1x128x8xbf16>
    "tpu.trace_start"() <{level = 10 : i32, message = "bcl,bld->bcd"}> : () -> ()
    %cst_42 = arith.constant dense<0.000000e+00> : vector<1x8x8xf32>
    %99 = tpu.matmul %97, %98, %cst_42 {dimension_numbers = #tpu.dot_dimension_numbers<[2], [1], [1], [2], [0, 0, 0, 1, 1, 2], [0], [0]>} : vector<1x8x128xbf16>, vector<1x128x8xbf16>, vector<1x8x8xf32> -> vector<1x8x8xf32>
    "tpu.trace_stop"() : () -> ()
    %100 = vector.shape_cast %99 : vector<1x8x8xf32> to vector<8x8xf32>
    %101 = arith.truncf %100 : vector<8x8xf32> to vector<8x8xbf16>
    %102 = vector.extract_strided_slice %19 {offsets = [8, 0], sizes = [8, 32], strides = [1, 1]} : vector<32x32xbf16> to vector<8x32xbf16>
    %cst_43 = arith.constant dense<0.000000e+00> : vector<8x32xf32>
    %103 = tpu.matmul %101, %102, %cst_43 {dimension_numbers = #tpu.dot_dimension_numbers<[1], [0], [0], [1], [0, 0, 1, 1], [], []>} : vector<8x8xbf16>, vector<8x32xbf16>, vector<8x32xf32> -> vector<8x32xf32>
    %104 = arith.addf %70, %103 : vector<8x32xf32>
    %105 = vector.extract_strided_slice %18 {offsets = [0, 16], sizes = [8, 8], strides = [1, 1]} : vector<8x32xbf16> to vector<8x8xbf16>
    %106 = vector.shape_cast %105 : vector<8x8xbf16> to vector<1x8x8xbf16>
    %107 = vector.extract_strided_slice %12 {offsets = [0, 0, 16], sizes = [1, 128, 8], strides = [1, 1, 1]} : vector<1x128x32xbf16> to vector<1x128x8xbf16>
    "tpu.trace_start"() <{level = 10 : i32, message = "bcd,bld->bcl"}> : () -> ()
    %cst_44 = arith.constant dense<0.000000e+00> : vector<1x8x128xf32>
    %108 = tpu.matmul %106, %107, %cst_44 {dimension_numbers = #tpu.dot_dimension_numbers<[2], [2], [1], [1], [0, 0, 0, 1, 1, 1], [0], [0]>} : vector<1x8x8xbf16>, vector<1x128x8xbf16>, vector<1x8x128xf32> -> vector<1x8x128xf32>
    "tpu.trace_stop"() : () -> ()
    %109 = vector.broadcast %25 : vector<1x1x128xf32> to vector<1x8x128xf32>
    %110 = arith.addf %108, %109 : vector<1x8x128xf32>
    %cst_45 = arith.constant dense<0xFF800000> : vector<1x8xf32>
    %111 = vector.multi_reduction <maximumf>, %110, %cst_45 [2] : vector<1x8x128xf32> to vector<1x8xf32>
    %112 = vector.shape_cast %111 : vector<1x8xf32> to vector<1x8x1xf32>
    %113 = vector.broadcast %112 : vector<1x8x1xf32> to vector<1x8x128xf32>
    %114 = arith.subf %110, %113 : vector<1x8x128xf32>
    %115 = math.exp %114 : vector<1x8x128xf32>
    %cst_46 = arith.constant dense<0.000000e+00> : vector<1x8xf32>
    %116 = vector.multi_reduction <add>, %115, %cst_46 [2] : vector<1x8x128xf32> to vector<1x8xf32>
    %117 = vector.shape_cast %116 : vector<1x8xf32> to vector<1x8x1xf32>
    %118 = tpu.reciprocal %117 {approx = true} : vector<1x8x1xf32> -> vector<1x8x1xf32>
    %119 = vector.broadcast %118 : vector<1x8x1xf32> to vector<1x8x128xf32>
    %120 = arith.mulf %115, %119 : vector<1x8x128xf32>
    %cst_47 = arith.constant 5.000000e-01 : f32
    %121 = vector.broadcast %cst_47 : f32 to vector<1x8x128xf32>
    %122 = arith.mulf %121, %120 : vector<1x8x128xf32>
    %123 = vector.broadcast %35 : vector<1x1x128xf32> to vector<1x8x128xf32>
    %124 = arith.addf %122, %123 : vector<1x8x128xf32>
    %cst_48 = arith.constant dense<0.000000e+00> : vector<1x8xf32>
    %125 = vector.multi_reduction <add>, %124, %cst_48 [2] : vector<1x8x128xf32> to vector<1x8xf32>
    %126 = vector.shape_cast %125 : vector<1x8xf32> to vector<1x8x1xf32>
    %cst_49 = arith.constant 9.99999971E-10 : f32
    %127 = vector.broadcast %cst_49 : f32 to vector<1x8x1xf32>
    %128 = arith.addf %126, %127 : vector<1x8x1xf32>
    %129 = vector.broadcast %128 : vector<1x8x1xf32> to vector<1x8x128xf32>
    %130 = arith.divf %124, %129 : vector<1x8x128xf32>
    %131 = arith.truncf %130 : vector<1x8x128xf32> to vector<1x8x128xbf16>
    %132 = vector.extract_strided_slice %14 {offsets = [0, 0, 16], sizes = [1, 128, 8], strides = [1, 1, 1]} : vector<1x128x32xbf16> to vector<1x128x8xbf16>
    "tpu.trace_start"() <{level = 10 : i32, message = "bcl,bld->bcd"}> : () -> ()
    %cst_50 = arith.constant dense<0.000000e+00> : vector<1x8x8xf32>
    %133 = tpu.matmul %131, %132, %cst_50 {dimension_numbers = #tpu.dot_dimension_numbers<[2], [1], [1], [2], [0, 0, 0, 1, 1, 2], [0], [0]>} : vector<1x8x128xbf16>, vector<1x128x8xbf16>, vector<1x8x8xf32> -> vector<1x8x8xf32>
    "tpu.trace_stop"() : () -> ()
    %134 = vector.shape_cast %133 : vector<1x8x8xf32> to vector<8x8xf32>
    %135 = arith.truncf %134 : vector<8x8xf32> to vector<8x8xbf16>
    %136 = vector.extract_strided_slice %19 {offsets = [16, 0], sizes = [8, 32], strides = [1, 1]} : vector<32x32xbf16> to vector<8x32xbf16>
    %cst_51 = arith.constant dense<0.000000e+00> : vector<8x32xf32>
    %137 = tpu.matmul %135, %136, %cst_51 {dimension_numbers = #tpu.dot_dimension_numbers<[1], [0], [0], [1], [0, 0, 1, 1], [], []>} : vector<8x8xbf16>, vector<8x32xbf16>, vector<8x32xf32> -> vector<8x32xf32>
    %138 = arith.addf %104, %137 : vector<8x32xf32>
    %139 = vector.extract_strided_slice %18 {offsets = [0, 24], sizes = [8, 8], strides = [1, 1]} : vector<8x32xbf16> to vector<8x8xbf16>
    %140 = vector.shape_cast %139 : vector<8x8xbf16> to vector<1x8x8xbf16>
    %141 = vector.extract_strided_slice %12 {offsets = [0, 0, 24], sizes = [1, 128, 8], strides = [1, 1, 1]} : vector<1x128x32xbf16> to vector<1x128x8xbf16>
    "tpu.trace_start"() <{level = 10 : i32, message = "bcd,bld->bcl"}> : () -> ()
    %cst_52 = arith.constant dense<0.000000e+00> : vector<1x8x128xf32>
    %142 = tpu.matmul %140, %141, %cst_52 {dimension_numbers = #tpu.dot_dimension_numbers<[2], [2], [1], [1], [0, 0, 0, 1, 1, 1], [0], [0]>} : vector<1x8x8xbf16>, vector<1x128x8xbf16>, vector<1x8x128xf32> -> vector<1x8x128xf32>
    "tpu.trace_stop"() : () -> ()
    %143 = vector.broadcast %25 : vector<1x1x128xf32> to vector<1x8x128xf32>
    %144 = arith.addf %142, %143 : vector<1x8x128xf32>
    %cst_53 = arith.constant dense<0xFF800000> : vector<1x8xf32>
    %145 = vector.multi_reduction <maximumf>, %144, %cst_53 [2] : vector<1x8x128xf32> to vector<1x8xf32>
    %146 = vector.shape_cast %145 : vector<1x8xf32> to vector<1x8x1xf32>
    %147 = vector.broadcast %146 : vector<1x8x1xf32> to vector<1x8x128xf32>
    %148 = arith.subf %144, %147 : vector<1x8x128xf32>
    %149 = math.exp %148 : vector<1x8x128xf32>
    %cst_54 = arith.constant dense<0.000000e+00> : vector<1x8xf32>
    %150 = vector.multi_reduction <add>, %149, %cst_54 [2] : vector<1x8x128xf32> to vector<1x8xf32>
    %151 = vector.shape_cast %150 : vector<1x8xf32> to vector<1x8x1xf32>
    %152 = tpu.reciprocal %151 {approx = true} : vector<1x8x1xf32> -> vector<1x8x1xf32>
    %153 = vector.broadcast %152 : vector<1x8x1xf32> to vector<1x8x128xf32>
    %154 = arith.mulf %149, %153 : vector<1x8x128xf32>
    %cst_55 = arith.constant 5.000000e-01 : f32
    %155 = vector.broadcast %cst_55 : f32 to vector<1x8x128xf32>
    %156 = arith.mulf %155, %154 : vector<1x8x128xf32>
    %157 = vector.broadcast %35 : vector<1x1x128xf32> to vector<1x8x128xf32>
    %158 = arith.addf %156, %157 : vector<1x8x128xf32>
    %cst_56 = arith.constant dense<0.000000e+00> : vector<1x8xf32>
    %159 = vector.multi_reduction <add>, %158, %cst_56 [2] : vector<1x8x128xf32> to vector<1x8xf32>
    %160 = vector.shape_cast %159 : vector<1x8xf32> to vector<1x8x1xf32>
    %cst_57 = arith.constant 9.99999971E-10 : f32
    %161 = vector.broadcast %cst_57 : f32 to vector<1x8x1xf32>
    %162 = arith.addf %160, %161 : vector<1x8x1xf32>
    %163 = vector.broadcast %162 : vector<1x8x1xf32> to vector<1x8x128xf32>
    %164 = arith.divf %158, %163 : vector<1x8x128xf32>
    %165 = arith.truncf %164 : vector<1x8x128xf32> to vector<1x8x128xbf16>
    %166 = vector.extract_strided_slice %14 {offsets = [0, 0, 24], sizes = [1, 128, 8], strides = [1, 1, 1]} : vector<1x128x32xbf16> to vector<1x128x8xbf16>
    "tpu.trace_start"() <{level = 10 : i32, message = "bcl,bld->bcd"}> : () -> ()
    %cst_58 = arith.constant dense<0.000000e+00> : vector<1x8x8xf32>
    %167 = tpu.matmul %165, %166, %cst_58 {dimension_numbers = #tpu.dot_dimension_numbers<[2], [1], [1], [2], [0, 0, 0, 1, 1, 2], [0], [0]>} : vector<1x8x128xbf16>, vector<1x128x8xbf16>, vector<1x8x8xf32> -> vector<1x8x8xf32>
    "tpu.trace_stop"() : () -> ()
    %168 = vector.shape_cast %167 : vector<1x8x8xf32> to vector<8x8xf32>
    %169 = arith.truncf %168 : vector<8x8xf32> to vector<8x8xbf16>
    %170 = vector.extract_strided_slice %19 {offsets = [24, 0], sizes = [8, 32], strides = [1, 1]} : vector<32x32xbf16> to vector<8x32xbf16>
    %cst_59 = arith.constant dense<0.000000e+00> : vector<8x32xf32>
    %171 = tpu.matmul %169, %170, %cst_59 {dimension_numbers = #tpu.dot_dimension_numbers<[1], [0], [0], [1], [0, 0, 1, 1], [], []>} : vector<8x8xbf16>, vector<8x32xbf16>, vector<8x32xf32> -> vector<8x32xf32>
    %172 = arith.addf %138, %171 : vector<8x32xf32>
    %c0_60 = arith.constant 0 : index
    %c0_61 = arith.constant 0 : index
    %173 = vector.load %arg11[%c0_60, %c0_61] : memref<1x32xf32, #tpu.memory_space<vmem>>, vector<1x32xf32>
    %174 = vector.broadcast %173 : vector<1x32xf32> to vector<8x32xf32>
    %175 = arith.addf %172, %174 : vector<8x32xf32>
    %176 = vector.shape_cast %175 : vector<8x32xf32> to vector<1x8x32xf32>
    %c0_62 = arith.constant 0 : index
    %c0_63 = arith.constant 0 : index
    %177 = vector.load %arg5[%c0_62, %c0_63] : memref<8x32xf32, #tpu.memory_space<vmem>>, vector<8x32xf32>
    %178 = vector.shape_cast %177 : vector<8x32xf32> to vector<1x8x32xf32>
    %179 = arith.addf %176, %178 : vector<1x8x32xf32>
    %c0_64 = arith.constant 0 : index
    %c0_65 = arith.constant 0 : index
    %180 = vector.load %arg12[%c0_64, %c0_65] : memref<1x32xf32, #tpu.memory_space<vmem>>, vector<1x32xf32>
    %c0_66 = arith.constant 0 : index
    %c0_67 = arith.constant 0 : index
    %181 = vector.load %arg13[%c0_66, %c0_67] : memref<1x32xf32, #tpu.memory_space<vmem>>, vector<1x32xf32>
    %cst_68 = arith.constant dense<0.000000e+00> : vector<1x8xf32>
    %182 = vector.multi_reduction <add>, %179, %cst_68 [2] : vector<1x8x32xf32> to vector<1x8xf32>
    %183 = vector.shape_cast %182 : vector<1x8xf32> to vector<1x8x1xf32>
    %cst_69 = arith.constant 3.200000e+01 : f32
    %184 = vector.broadcast %cst_69 : f32 to vector<1x8x1xf32>
    %185 = arith.divf %183, %184 : vector<1x8x1xf32>
    %186 = vector.broadcast %185 : vector<1x8x1xf32> to vector<1x8x32xf32>
    %187 = arith.subf %179, %186 : vector<1x8x32xf32>
    %188 = arith.mulf %187, %187 : vector<1x8x32xf32>
    %cst_70 = arith.constant dense<0.000000e+00> : vector<1x8xf32>
    %189 = vector.multi_reduction <add>, %188, %cst_70 [2] : vector<1x8x32xf32> to vector<1x8xf32>
    %190 = vector.shape_cast %189 : vector<1x8xf32> to vector<1x8x1xf32>
    %cst_71 = arith.constant 3.200000e+01 : f32
    %191 = vector.broadcast %cst_71 : f32 to vector<1x8x1xf32>
    %192 = arith.divf %190, %191 : vector<1x8x1xf32>
    %193 = vector.broadcast %185 : vector<1x8x1xf32> to vector<1x8x32xf32>
    %194 = arith.subf %179, %193 : vector<1x8x32xf32>
    %cst_72 = arith.constant 9.99999974E-6 : f32
    %195 = vector.broadcast %cst_72 : f32 to vector<1x8x1xf32>
    %196 = arith.addf %192, %195 : vector<1x8x1xf32>
    %197 = math.rsqrt %196 : vector<1x8x1xf32>
    %198 = vector.broadcast %197 : vector<1x8x1xf32> to vector<1x8x32xf32>
    %199 = arith.mulf %194, %198 : vector<1x8x32xf32>
    %200 = vector.shape_cast %180 : vector<1x32xf32> to vector<1x1x32xf32>
    %201 = vector.broadcast %200 : vector<1x1x32xf32> to vector<1x8x32xf32>
    %202 = arith.mulf %199, %201 : vector<1x8x32xf32>
    %203 = vector.shape_cast %181 : vector<1x32xf32> to vector<1x1x32xf32>
    %204 = vector.broadcast %203 : vector<1x1x32xf32> to vector<1x8x32xf32>
    %205 = arith.addf %202, %204 : vector<1x8x32xf32>
    %206 = vector.shape_cast %205 : vector<1x8x32xf32> to vector<8x32xf32>
    %207 = arith.truncf %206 : vector<8x32xf32> to vector<8x32xbf16>
    %c0_73 = arith.constant 0 : index
    %c0_74 = arith.constant 0 : index
    %208 = vector.load %arg14[%c0_73, %c0_74] : memref<32x128xbf16, #tpu.memory_space<vmem>>, vector<32x128xbf16>
    %cst_75 = arith.constant dense<0.000000e+00> : vector<8x128xf32>
    %209 = tpu.matmul %207, %208, %cst_75 {dimension_numbers = #tpu.dot_dimension_numbers<[1], [0], [0], [1], [0, 0, 1, 1], [], []>} : vector<8x32xbf16>, vector<32x128xbf16>, vector<8x128xf32> -> vector<8x128xf32>
    %c0_76 = arith.constant 0 : index
    %c0_77 = arith.constant 0 : index
    %210 = vector.load %arg15[%c0_76, %c0_77] : memref<1x128xf32, #tpu.memory_space<vmem>>, vector<1x128xf32>
    %211 = vector.broadcast %210 : vector<1x128xf32> to vector<8x128xf32>
    %212 = arith.addf %209, %211 : vector<8x128xf32>
    %cst_78 = arith.constant 0.000000e+00 : f32
    %213 = vector.broadcast %cst_78 : f32 to vector<8x128xf32>
    %214 = arith.maximumf %212, %213 : vector<8x128xf32>
    %215 = arith.truncf %214 : vector<8x128xf32> to vector<8x128xbf16>
    %c0_79 = arith.constant 0 : index
    %c0_80 = arith.constant 0 : index
    %216 = vector.load %arg16[%c0_79, %c0_80] : memref<128x32xbf16, #tpu.memory_space<vmem>>, vector<128x32xbf16>
    %cst_81 = arith.constant dense<0.000000e+00> : vector<8x32xf32>
    %217 = tpu.matmul %215, %216, %cst_81 {dimension_numbers = #tpu.dot_dimension_numbers<[1], [0], [0], [1], [0, 0, 1, 1], [], []>} : vector<8x128xbf16>, vector<128x32xbf16>, vector<8x32xf32> -> vector<8x32xf32>
    %c0_82 = arith.constant 0 : index
    %c0_83 = arith.constant 0 : index
    %218 = vector.load %arg17[%c0_82, %c0_83] : memref<1x32xf32, #tpu.memory_space<vmem>>, vector<1x32xf32>
    %219 = vector.broadcast %218 : vector<1x32xf32> to vector<8x32xf32>
    %220 = arith.addf %217, %219 : vector<8x32xf32>
    %221 = arith.addf %206, %220 : vector<8x32xf32>
    %c0_84 = arith.constant 0 : index
    %c0_85 = arith.constant 0 : index
    %222 = vector.load %arg18[%c0_84, %c0_85] : memref<1x32xf32, #tpu.memory_space<vmem>>, vector<1x32xf32>
    %c0_86 = arith.constant 0 : index
    %c0_87 = arith.constant 0 : index
    %223 = vector.load %arg19[%c0_86, %c0_87] : memref<1x32xf32, #tpu.memory_space<vmem>>, vector<1x32xf32>
    %cst_88 = arith.constant dense<0.000000e+00> : vector<8xf32>
    %224 = vector.multi_reduction <add>, %221, %cst_88 [1] : vector<8x32xf32> to vector<8xf32>
    %225 = vector.shape_cast %224 : vector<8xf32> to vector<8x1xf32>
    %cst_89 = arith.constant 3.200000e+01 : f32
    %226 = vector.broadcast %cst_89 : f32 to vector<8x1xf32>
    %227 = arith.divf %225, %226 : vector<8x1xf32>
    %228 = vector.broadcast %227 : vector<8x1xf32> to vector<8x32xf32>
    %229 = arith.subf %221, %228 : vector<8x32xf32>
    %230 = arith.mulf %229, %229 : vector<8x32xf32>
    %cst_90 = arith.constant dense<0.000000e+00> : vector<8xf32>
    %231 = vector.multi_reduction <add>, %230, %cst_90 [1] : vector<8x32xf32> to vector<8xf32>
    %232 = vector.shape_cast %231 : vector<8xf32> to vector<8x1xf32>
    %cst_91 = arith.constant 3.200000e+01 : f32
    %233 = vector.broadcast %cst_91 : f32 to vector<8x1xf32>
    %234 = arith.divf %232, %233 : vector<8x1xf32>
    %235 = vector.broadcast %227 : vector<8x1xf32> to vector<8x32xf32>
    %236 = arith.subf %221, %235 : vector<8x32xf32>
    %cst_92 = arith.constant 9.99999974E-6 : f32
    %237 = vector.broadcast %cst_92 : f32 to vector<8x1xf32>
    %238 = arith.addf %234, %237 : vector<8x1xf32>
    %239 = math.rsqrt %238 : vector<8x1xf32>
    %240 = vector.broadcast %239 : vector<8x1xf32> to vector<8x32xf32>
    %241 = arith.mulf %236, %240 : vector<8x32xf32>
    %242 = vector.broadcast %222 : vector<1x32xf32> to vector<8x32xf32>
    %243 = arith.mulf %241, %242 : vector<8x32xf32>
    %244 = vector.broadcast %223 : vector<1x32xf32> to vector<8x32xf32>
    %245 = arith.addf %243, %244 : vector<8x32xf32>
    %246 = vector.shape_cast %245 : vector<8x32xf32> to vector<1x8x32xf32>
    %c0_93 = arith.constant 0 : index
    %c0_94 = arith.constant 0 : index
    %c0_95 = arith.constant 0 : index
    %247 = vector.load %arg20[%c0_93, %c0_94, %c0_95] : memref<1x8x32xf32, #tpu.memory_space<vmem>>, vector<1x8x32xf32>
    tpu.vector_store %arg20[%c0_93, %c0_94, %c0_95], %246 {strides = array<i32>} : memref<1x8x32xf32, #tpu.memory_space<vmem>>, vector<1x8x32xf32>,
    return
  }
  func.func @transform_0(%arg0: i32) -> (i32, i32) {
    %c0_i32 = arith.constant 0 : i32
    %c0_i32_0 = arith.constant 0 : i32
    return %arg0, %c0_i32 : i32, i32
  }
  func.func @transform_1(%arg0: i32) -> (i32, i32, i32) {
    %c0_i32 = arith.constant 0 : i32
    %c0_i32_0 = arith.constant 0 : i32
    %c0_i32_1 = arith.constant 0 : i32
    return %arg0, %c0_i32, %c0_i32_0 : i32, i32, i32
  }
  func.func @transform_2(%arg0: i32) -> (i32, i32, i32) {
    %c0_i32 = arith.constant 0 : i32
    %c0_i32_0 = arith.constant 0 : i32
    %c0_i32_1 = arith.constant 0 : i32
    return %arg0, %c0_i32, %c0_i32_0 : i32, i32, i32
  }
  func.func @transform_3(%arg0: i32) -> (i32, i32) {
    %c0_i32 = arith.constant 0 : i32
    %c0_i32_0 = arith.constant 0 : i32
    %c0_i32_1 = arith.constant 0 : i32
    return %c0_i32, %c0_i32_0 : i32, i32
  }
  func.func @transform_4(%arg0: i32) -> (i32, i32) {
    %c0_i32 = arith.constant 0 : i32
    %c0_i32_0 = arith.constant 0 : i32
    %c0_i32_1 = arith.constant 0 : i32
    return %c0_i32, %c0_i32_0 : i32, i32
  }
  func.func @transform_5(%arg0: i32) -> (i32, i32) {
    %c0_i32 = arith.constant 0 : i32
    %c0_i32_0 = arith.constant 0 : i32
    %c0_i32_1 = arith.constant 0 : i32
    return %c0_i32, %c0_i32_0 : i32, i32
  }
  func.func @transform_6(%arg0: i32) -> (i32, i32) {
    %c0_i32 = arith.constant 0 : i32
    %c0_i32_0 = arith.constant 0 : i32
    %c0_i32_1 = arith.constant 0 : i32
    return %c0_i32, %c0_i32_0 : i32, i32
  }
  func.func @transform_7(%arg0: i32) -> (i32, i32) {
    %c0_i32 = arith.constant 0 : i32
    %c0_i32_0 = arith.constant 0 : i32
    %c0_i32_1 = arith.constant 0 : i32
    return %c0_i32, %c0_i32_0 : i32, i32
  }
  func.func @transform_8(%arg0: i32) -> (i32, i32) {
    %c0_i32 = arith.constant 0 : i32
    %c0_i32_0 = arith.constant 0 : i32
    %c0_i32_1 = arith.constant 0 : i32
    return %c0_i32, %c0_i32_0 : i32, i32
  }
  func.func @transform_9(%arg0: i32) -> (i32, i32) {
    %c0_i32 = arith.constant 0 : i32
    %c0_i32_0 = arith.constant 0 : i32
    %c0_i32_1 = arith.constant 0 : i32
    return %c0_i32, %c0_i32_0 : i32, i32
  }
  func.func @transform_10(%arg0: i32) -> (i32, i32) {
    %c0_i32 = arith.constant 0 : i32
    %c0_i32_0 = arith.constant 0 : i32
    %c0_i32_1 = arith.constant 0 : i32
    return %c0_i32, %c0_i32_0 : i32, i32
  }
  func.func @transform_11(%arg0: i32) -> (i32, i32) {
    %c0_i32 = arith.constant 0 : i32
    %c0_i32_0 = arith.constant 0 : i32
    %c0_i32_1 = arith.constant 0 : i32
    return %c0_i32, %c0_i32_0 : i32, i32
  }
  func.func @transform_12(%arg0: i32) -> (i32, i32) {
    %c0_i32 = arith.constant 0 : i32
    %c0_i32_0 = arith.constant 0 : i32
    %c0_i32_1 = arith.constant 0 : i32
    return %c0_i32, %c0_i32_0 : i32, i32
  }
  func.func @transform_13(%arg0: i32) -> (i32, i32) {
    %c0_i32 = arith.constant 0 : i32
    %c0_i32_0 = arith.constant 0 : i32
    %c0_i32_1 = arith.constant 0 : i32
    return %c0_i32, %c0_i32_0 : i32, i32
  }
  func.func @transform_14(%arg0: i32) -> (i32, i32) {
    %c0_i32 = arith.constant 0 : i32
    %c0_i32_0 = arith.constant 0 : i32
    %c0_i32_1 = arith.constant 0 : i32
    return %c0_i32, %c0_i32_0 : i32, i32
  }
  func.func @transform_15(%arg0: i32) -> (i32, i32) {
    %c0_i32 = arith.constant 0 : i32
    %c0_i32_0 = arith.constant 0 : i32
    %c0_i32_1 = arith.constant 0 : i32
    return %c0_i32, %c0_i32_0 : i32, i32
  }
  func.func @transform_16(%arg0: i32) -> (i32, i32) {
    %c0_i32 = arith.constant 0 : i32
    %c0_i32_0 = arith.constant 0 : i32
    %c0_i32_1 = arith.constant 0 : i32
    return %c0_i32, %c0_i32_0 : i32, i32
  }
  func.func @transform_17(%arg0: i32) -> (i32, i32) {
    %c0_i32 = arith.constant 0 : i32
    %c0_i32_0 = arith.constant 0 : i32
    %c0_i32_1 = arith.constant 0 : i32
    return %c0_i32, %c0_i32_0 : i32, i32
  }
  func.func @transform_18(%arg0: i32) -> (i32, i32) {
    %c0_i32 = arith.constant 0 : i32
    %c0_i32_0 = arith.constant 0 : i32
    %c0_i32_1 = arith.constant 0 : i32
    return %c0_i32, %c0_i32_0 : i32, i32
  }
  func.func @transform_19(%arg0: i32) -> (i32, i32, i32) {
    %c0_i32 = arith.constant 0 : i32
    %c0_i32_0 = arith.constant 0 : i32
    %c0_i32_1 = arith.constant 0 : i32
    return %arg0, %c0_i32, %c0_i32_0 : i32, i32, i32
  }
}

</mosaic_0001>

<llo_original>
// kernel: tpu_custom_call.1
$region0: #{tpu_custom_call.1}
  #allocation0 [shape = 'u32[]', space=smem, size = 0x4, offset = 0x4, fixed_abs, tag = 'smem constant byte address 0x4 - core index']
  #allocation1 [shape = 'u32[144,128]{1,0:T(1,128)}', space=vmem, size = 0x12000, scoped, tag = 'internal scratch']
  %s0 = inlined_call_operand.vmem [shape: bf16[256,32], index: 0, kind: input, shape index: {}]
  %s1 = inlined_call_operand.vmem [shape: f32[2,1,128], index: 1, kind: input, shape index: {}]
  %s2 = inlined_call_operand.vmem [shape: f32[2,1,128], index: 2, kind: input, shape index: {}]
  %s3 = inlined_call_operand.vmem [shape: f32[8,32], index: 3, kind: input, shape index: {}]
  %s4 = inlined_call_operand.vmem [shape: f32[8,32], index: 4, kind: input, shape index: {}]
  %s5 = inlined_call_operand.vmem [shape: bf16[32,32], index: 5, kind: input, shape index: {}]
  %s6 = inlined_call_operand.vmem [shape: f32[1,32], index: 6, kind: input, shape index: {}]
  %s7 = inlined_call_operand.vmem [shape: bf16[32,32], index: 7, kind: input, shape index: {}]
  %s8 = inlined_call_operand.vmem [shape: f32[1,32], index: 8, kind: input, shape index: {}]
  %s9 = inlined_call_operand.vmem [shape: bf16[32,32], index: 9, kind: input, shape index: {}]
  %s10 = inlined_call_operand.vmem [shape: f32[1,32], index: 10, kind: input, shape index: {}]
  %s11 = inlined_call_operand.vmem [shape: f32[1,32], index: 11, kind: input, shape index: {}]
  %s12 = inlined_call_operand.vmem [shape: f32[1,32], index: 12, kind: input, shape index: {}]
  %s13 = inlined_call_operand.vmem [shape: bf16[32,128], index: 13, kind: input, shape index: {}]
  %s14 = inlined_call_operand.vmem [shape: f32[1,128], index: 14, kind: input, shape index: {}]
  %s15 = inlined_call_operand.vmem [shape: bf16[128,32], index: 15, kind: input, shape index: {}]
  %s16 = inlined_call_operand.vmem [shape: f32[1,32], index: 16, kind: input, shape index: {}]
  %s17 = inlined_call_operand.vmem [shape: f32[1,32], index: 17, kind: input, shape index: {}]
  %s18 = inlined_call_operand.vmem [shape: f32[1,32], index: 18, kind: input, shape index: {}]
  %s19 = inlined_call_operand.hbm [shape: f32[2,8,32], index: 19, kind: output, shape index: {}]
  %s20 = sld [smem:[#allocation0]]
  $region109: #{tpu_custom_call.1} parent=0
    _
  %s22 = ssub.s32 1, %s20
  %s23 = scalar_select 0, %s22, %s20
  $region1: #{tpu_custom_call.1} parent=0
    #allocation2 [shape = 'u8[8192]{0}', space=vmem, size = 0x2000, scoped, tag = 'output window, operand 0']
    #allocation3 [shape = 's32[2]{0}', space=sflag, size = 0x8, scoped, tag = 'scoped memory for tpu_custom_call.1']
    %24 = vsyncpa [#allocation3], 0
    %s25 = scalar_lea.sflag [#allocation3], 1
    %26 = vsyncpa %s25, 0
    loop: start=0, step=1, limit=4
    $region2: #{tpu_custom_call.1} parent=1 // loop_pre_header
      _
    $region3: #{tpu_custom_call.1} parent=1 // loop_header
      %s28 = sphi 0, %s32
      %p29 = scmp.ge.s32.totalorder %s28, 4
      %s38 = sphi 0, %s40
      %s41 = sphi 0, %s38
      %s42 = sphi 0, %s41
      %s58 = sphi 0, %s42
      %s64 = sphi 0, %s66
      %s67 = sphi 0, %s64
      %s68 = sphi 0, %s67
      %s84 = sphi 0, %s68
      %s90 = sphi 0, %s92
      %s93 = sphi 0, %s90
      %s94 = sphi 0, %s93
      %s110 = sphi 0, %s94
      %s114 = sphi 0, %s114
      %s116 = sphi 0, %s114
      %s117 = sphi 0, %s116
      %s131 = sphi 0, %s117
      %s135 = sphi 0, %s135
      %s137 = sphi 0, %s135
      %s138 = sphi 0, %s137
      %s152 = sphi 0, %s138
      %s156 = sphi 0, %s156
      %s158 = sphi 0, %s156
      %s159 = sphi 0, %s158
      %s173 = sphi 0, %s159
      %s177 = sphi 0, %s177
      %s179 = sphi 0, %s177
      %s180 = sphi 0, %s179
      %s194 = sphi 0, %s180
      %s198 = sphi 0, %s198
      %s200 = sphi 0, %s198
      %s201 = sphi 0, %s200
      %s215 = sphi 0, %s201
      %s219 = sphi 0, %s219
      %s221 = sphi 0, %s219
      %s222 = sphi 0, %s221
      %s236 = sphi 0, %s222
      %s240 = sphi 0, %s240
      %s242 = sphi 0, %s240
      %s243 = sphi 0, %s242
      %s257 = sphi 0, %s243
      %s261 = sphi 0, %s261
      %s263 = sphi 0, %s261
      %s264 = sphi 0, %s263
      %s278 = sphi 0, %s264
      %s282 = sphi 0, %s282
      %s284 = sphi 0, %s282
      %s285 = sphi 0, %s284
      %s299 = sphi 0, %s285
      %s303 = sphi 0, %s303
      %s305 = sphi 0, %s303
      %s306 = sphi 0, %s305
      %s320 = sphi 0, %s306
      %s324 = sphi 0, %s324
      %s326 = sphi 0, %s324
      %s327 = sphi 0, %s326
      %s341 = sphi 0, %s327
      %s345 = sphi 0, %s345
      %s347 = sphi 0, %s345
      %s348 = sphi 0, %s347
      %s362 = sphi 0, %s348
      %s366 = sphi 0, %s366
      %s368 = sphi 0, %s366
      %s369 = sphi 0, %s368
      %s383 = sphi 0, %s369
      %s387 = sphi 0, %s387
      %s389 = sphi 0, %s387
      %s390 = sphi 0, %s389
      %s404 = sphi 0, %s390
      %s408 = sphi 0, %s408
      %s410 = sphi 0, %s408
      %s411 = sphi 0, %s410
      %s425 = sphi 0, %s411
      %s429 = sphi 0, %s429
      %s431 = sphi 0, %s429
      %s432 = sphi 0, %s431
      %s446 = sphi 0, %s432
      %s452 = sphi 0, %s454
      %s455 = sphi 0, %s452
      %s456 = sphi 0, %s455
      %s472 = sphi 0, %s456
    $region4: #{tpu_custom_call.1} parent=1 // loop_header_branch
      %31 = sbr.rel (%p29) target = $region8
    $region5: #{tpu_custom_call.1} parent=1 // loop_body
      %s33 = ssub.s32 %s28, 1
      %s34 = ssub.s32 %s28, 2
      %s35 = sadd.s32 %s28, 1
      %s36 = ssub.s32 %s28, %s35
      %p37 = scmp.eq.s32.totalorder %s36, 0
      %s39 = sadd.s32 %s38, 1
      %s40 = scalar_select %p37, %s38, %s39
      %p43 = pneg %p37
      %p44 = scmp.eq.s32.totalorder %s28, 1
      %p45 = por %p43, %p44
      %p46 = scmp.ne.s32.totalorder %s38, %s41
      %p47 = scmp.eq.s32.totalorder %s28, 0
      %p48 = por %p46, %p47
      %p49 = scmp.ne.s32.totalorder %s38, %s41
      %p50 = scmp.eq.s32.totalorder %s33, 1
      %p51 = por %p49, %p50
      %p52 = scmp.ne.s32.totalorder %s41, %s42
      %p53 = scmp.eq.s32.totalorder %s33, 0
      %p54 = por %p52, %p53
      %p55 = scmp.ne.s32.totalorder %s41, %s42
      %p56 = scmp.eq.s32.totalorder %s34, 1
      %p57 = por %p55, %p56
      %p59 = scmp.ne.s32.totalorder %s42, %s58
      %p60 = scmp.eq.s32.totalorder %s34, 0
      %p61 = por %p59, %p60
      %s62 = ssub.s32 %s28, %s35
      %p63 = scmp.eq.s32.totalorder %s62, 0
      %s65 = sadd.s32 %s64, 1
      %s66 = scalar_select %p63, %s64, %s65
      %p69 = pneg %p63
      %p70 = scmp.eq.s32.totalorder %s28, 1
      %p71 = por %p69, %p70
      %p72 = scmp.ne.s32.totalorder %s64, %s67
      %p73 = scmp.eq.s32.totalorder %s28, 0
      %p74 = por %p72, %p73
      %p75 = scmp.ne.s32.totalorder %s64, %s67
      %p76 = scmp.eq.s32.totalorder %s33, 1
      %p77 = por %p75, %p76
      %p78 = scmp.ne.s32.totalorder %s67, %s68
      %p79 = scmp.eq.s32.totalorder %s33, 0
      %p80 = por %p78, %p79
      %p81 = scmp.ne.s32.totalorder %s67, %s68
      %p82 = scmp.eq.s32.totalorder %s34, 1
      %p83 = por %p81, %p82
      %p85 = scmp.ne.s32.totalorder %s68, %s84
      %p86 = scmp.eq.s32.totalorder %s34, 0
      %p87 = por %p85, %p86
      %s88 = ssub.s32 %s28, %s35
      %p89 = scmp.eq.s32.totalorder %s88, 0
      %s91 = sadd.s32 %s90, 1
      %s92 = scalar_select %p89, %s90, %s91
      %p95 = pneg %p89
      %p96 = scmp.eq.s32.totalorder %s28, 1
      %p97 = por %p95, %p96
      %p98 = scmp.ne.s32.totalorder %s90, %s93
      %p99 = scmp.eq.s32.totalorder %s28, 0
      %p100 = por %p98, %p99
      %p101 = scmp.ne.s32.totalorder %s90, %s93
      %p102 = scmp.eq.s32.totalorder %s33, 1
      %p103 = por %p101, %p102
      %p104 = scmp.ne.s32.totalorder %s93, %s94
      %p105 = scmp.eq.s32.totalorder %s33, 0
      %p106 = por %p104, %p105
      %p107 = scmp.ne.s32.totalorder %s93, %s94
      %p108 = scmp.eq.s32.totalorder %s34, 1
      %p109 = por %p107, %p108
      %p111 = scmp.ne.s32.totalorder %s94, %s110
      %p112 = scmp.eq.s32.totalorder %s34, 0
      %p113 = por %p111, %p112
      %s115 = sadd.s32 %s114, 1
      %p118 = scmp.eq.s32.totalorder %s28, 1
      %p119 = scmp.ne.s32.totalorder %s114, %s116
      %p120 = scmp.eq.s32.totalorder %s28, 0
      %p121 = por %p119, %p120
      %p122 = scmp.ne.s32.totalorder %s114, %s116
      %p123 = scmp.eq.s32.totalorder %s33, 1
      %p124 = por %p122, %p123
      %p125 = scmp.ne.s32.totalorder %s116, %s117
      %p126 = scmp.eq.s32.totalorder %s33, 0
      %p127 = por %p125, %p126
      %p128 = scmp.ne.s32.totalorder %s116, %s117
      %p129 = scmp.eq.s32.totalorder %s34, 1
      %p130 = por %p128, %p129
      %p132 = scmp.ne.s32.totalorder %s117, %s131
      %p133 = scmp.eq.s32.totalorder %s34, 0
      %p134 = por %p132, %p133
      %s136 = sadd.s32 %s135, 1
      %p139 = scmp.eq.s32.totalorder %s28, 1
      %p140 = scmp.ne.s32.totalorder %s135, %s137
      %p141 = scmp.eq.s32.totalorder %s28, 0
      %p142 = por %p140, %p141
      %p143 = scmp.ne.s32.totalorder %s135, %s137
      %p144 = scmp.eq.s32.totalorder %s33, 1
      %p145 = por %p143, %p144
      %p146 = scmp.ne.s32.totalorder %s137, %s138
      %p147 = scmp.eq.s32.totalorder %s33, 0
      %p148 = por %p146, %p147
      %p149 = scmp.ne.s32.totalorder %s137, %s138
      %p150 = scmp.eq.s32.totalorder %s34, 1
      %p151 = por %p149, %p150
      %p153 = scmp.ne.s32.totalorder %s138, %s152
      %p154 = scmp.eq.s32.totalorder %s34, 0
      %p155 = por %p153, %p154
      %s157 = sadd.s32 %s156, 1
      %p160 = scmp.eq.s32.totalorder %s28, 1
      %p161 = scmp.ne.s32.totalorder %s156, %s158
      %p162 = scmp.eq.s32.totalorder %s28, 0
      %p163 = por %p161, %p162
      %p164 = scmp.ne.s32.totalorder %s156, %s158
      %p165 = scmp.eq.s32.totalorder %s33, 1
      %p166 = por %p164, %p165
      %p167 = scmp.ne.s32.totalorder %s158, %s159
      %p168 = scmp.eq.s32.totalorder %s33, 0
      %p169 = por %p167, %p168
      %p170 = scmp.ne.s32.totalorder %s158, %s159
      %p171 = scmp.eq.s32.totalorder %s34, 1
      %p172 = por %p170, %p171
      %p174 = scmp.ne.s32.totalorder %s159, %s173
      %p175 = scmp.eq.s32.totalorder %s34, 0
      %p176 = por %p174, %p175
      %s178 = sadd.s32 %s177, 1
      %p181 = scmp.eq.s32.totalorder %s28, 1
      %p182 = scmp.ne.s32.totalorder %s177, %s179
      %p183 = scmp.eq.s32.totalorder %s28, 0
      %p184 = por %p182, %p183
      %p185 = scmp.ne.s32.totalorder %s177, %s179
      %p186 = scmp.eq.s32.totalorder %s33, 1
      %p187 = por %p185, %p186
      %p188 = scmp.ne.s32.totalorder %s179, %s180
      %p189 = scmp.eq.s32.totalorder %s33, 0
      %p190 = por %p188, %p189
      %p191 = scmp.ne.s32.totalorder %s179, %s180
      %p192 = scmp.eq.s32.totalorder %s34, 1
      %p193 = por %p191, %p192
      %p195 = scmp.ne.s32.totalorder %s180, %s194
      %p196 = scmp.eq.s32.totalorder %s34, 0
      %p197 = por %p195, %p196
      %s199 = sadd.s32 %s198, 1
      %p202 = scmp.eq.s32.totalorder %s28, 1
      %p203 = scmp.ne.s32.totalorder %s198, %s200
      %p204 = scmp.eq.s32.totalorder %s28, 0
      %p205 = por %p203, %p204
      %p206 = scmp.ne.s32.totalorder %s198, %s200
      %p207 = scmp.eq.s32.totalorder %s33, 1
      %p208 = por %p206, %p207
      %p209 = scmp.ne.s32.totalorder %s200, %s201
      %p210 = scmp.eq.s32.totalorder %s33, 0
      %p211 = por %p209, %p210
      %p212 = scmp.ne.s32.totalorder %s200, %s201
      %p213 = scmp.eq.s32.totalorder %s34, 1
      %p214 = por %p212, %p213
      %p216 = scmp.ne.s32.totalorder %s201, %s215
      %p217 = scmp.eq.s32.totalorder %s34, 0
      %p218 = por %p216, %p217
      %s220 = sadd.s32 %s219, 1
      %p223 = scmp.eq.s32.totalorder %s28, 1
      %p224 = scmp.ne.s32.totalorder %s219, %s221
      %p225 = scmp.eq.s32.totalorder %s28, 0
      %p226 = por %p224, %p225
      %p227 = scmp.ne.s32.totalorder %s219, %s221
      %p228 = scmp.eq.s32.totalorder %s33, 1
      %p229 = por %p227, %p228
      %p230 = scmp.ne.s32.totalorder %s221, %s222
      %p231 = scmp.eq.s32.totalorder %s33, 0
      %p232 = por %p230, %p231
      %p233 = scmp.ne.s32.totalorder %s221, %s222
      %p234 = scmp.eq.s32.totalorder %s34, 1
      %p235 = por %p233, %p234
      %p237 = scmp.ne.s32.totalorder %s222, %s236
      %p238 = scmp.eq.s32.totalorder %s34, 0
      %p239 = por %p237, %p238
      %s241 = sadd.s32 %s240, 1
      %p244 = scmp.eq.s32.totalorder %s28, 1
      %p245 = scmp.ne.s32.totalorder %s240, %s242
      %p246 = scmp.eq.s32.totalorder %s28, 0
      %p247 = por %p245, %p246
      %p248 = scmp.ne.s32.totalorder %s240, %s242
      %p249 = scmp.eq.s32.totalorder %s33, 1
      %p250 = por %p248, %p249
      %p251 = scmp.ne.s32.totalorder %s242, %s243
      %p252 = scmp.eq.s32.totalorder %s33, 0
      %p253 = por %p251, %p252
      %p254 = scmp.ne.s32.totalorder %s242, %s243
      %p255 = scmp.eq.s32.totalorder %s34, 1
      %p256 = por %p254, %p255
      %p258 = scmp.ne.s32.totalorder %s243, %s257
      %p259 = scmp.eq.s32.totalorder %s34, 0
      %p260 = por %p258, %p259
      %s262 = sadd.s32 %s261, 1
      %p265 = scmp.eq.s32.totalorder %s28, 1
      %p266 = scmp.ne.s32.totalorder %s261, %s263
      %p267 = scmp.eq.s32.totalorder %s28, 0
      %p268 = por %p266, %p267
      %p269 = scmp.ne.s32.totalorder %s261, %s263
      %p270 = scmp.eq.s32.totalorder %s33, 1
      %p271 = por %p269, %p270
      %p272 = scmp.ne.s32.totalorder %s263, %s264
      %p273 = scmp.eq.s32.totalorder %s33, 0
      %p274 = por %p272, %p273
      %p275 = scmp.ne.s32.totalorder %s263, %s264
      %p276 = scmp.eq.s32.totalorder %s34, 1
      %p277 = por %p275, %p276
      %p279 = scmp.ne.s32.totalorder %s264, %s278
      %p280 = scmp.eq.s32.totalorder %s34, 0
      %p281 = por %p279, %p280
      %s283 = sadd.s32 %s282, 1
      %p286 = scmp.eq.s32.totalorder %s28, 1
      %p287 = scmp.ne.s32.totalorder %s282, %s284
      %p288 = scmp.eq.s32.totalorder %s28, 0
      %p289 = por %p287, %p288
      %p290 = scmp.ne.s32.totalorder %s282, %s284
      %p291 = scmp.eq.s32.totalorder %s33, 1
      %p292 = por %p290, %p291
      %p293 = scmp.ne.s32.totalorder %s284, %s285
      %p294 = scmp.eq.s32.totalorder %s33, 0
      %p295 = por %p293, %p294
      %p296 = scmp.ne.s32.totalorder %s284, %s285
      %p297 = scmp.eq.s32.totalorder %s34, 1
      %p298 = por %p296, %p297
      %p300 = scmp.ne.s32.totalorder %s285, %s299
      %p301 = scmp.eq.s32.totalorder %s34, 0
      %p302 = por %p300, %p301
      %s304 = sadd.s32 %s303, 1
      %p307 = scmp.eq.s32.totalorder %s28, 1
      %p308 = scmp.ne.s32.totalorder %s303, %s305
      %p309 = scmp.eq.s32.totalorder %s28, 0
      %p310 = por %p308, %p309
      %p311 = scmp.ne.s32.totalorder %s303, %s305
      %p312 = scmp.eq.s32.totalorder %s33, 1
      %p313 = por %p311, %p312
      %p314 = scmp.ne.s32.totalorder %s305, %s306
      %p315 = scmp.eq.s32.totalorder %s33, 0
      %p316 = por %p314, %p315
      %p317 = scmp.ne.s32.totalorder %s305, %s306
      %p318 = scmp.eq.s32.totalorder %s34, 1
      %p319 = por %p317, %p318
      %p321 = scmp.ne.s32.totalorder %s306, %s320
      %p322 = scmp.eq.s32.totalorder %s34, 0
      %p323 = por %p321, %p322
      %s325 = sadd.s32 %s324, 1
      %p328 = scmp.eq.s32.totalorder %s28, 1
      %p329 = scmp.ne.s32.totalorder %s324, %s326
      %p330 = scmp.eq.s32.totalorder %s28, 0
      %p331 = por %p329, %p330
      %p332 = scmp.ne.s32.totalorder %s324, %s326
      %p333 = scmp.eq.s32.totalorder %s33, 1
      %p334 = por %p332, %p333
      %p335 = scmp.ne.s32.totalorder %s326, %s327
      %p336 = scmp.eq.s32.totalorder %s33, 0
      %p337 = por %p335, %p336
      %p338 = scmp.ne.s32.totalorder %s326, %s327
      %p339 = scmp.eq.s32.totalorder %s34, 1
      %p340 = por %p338, %p339
      %p342 = scmp.ne.s32.totalorder %s327, %s341
      %p343 = scmp.eq.s32.totalorder %s34, 0
      %p344 = por %p342, %p343
      %s346 = sadd.s32 %s345, 1
      %p349 = scmp.eq.s32.totalorder %s28, 1
      %p350 = scmp.ne.s32.totalorder %s345, %s347
      %p351 = scmp.eq.s32.totalorder %s28, 0
      %p352 = por %p350, %p351
      %p353 = scmp.ne.s32.totalorder %s345, %s347
      %p354 = scmp.eq.s32.totalorder %s33, 1
      %p355 = por %p353, %p354
      %p356 = scmp.ne.s32.totalorder %s347, %s348
      %p357 = scmp.eq.s32.totalorder %s33, 0
      %p358 = por %p356, %p357
      %p359 = scmp.ne.s32.totalorder %s347, %s348
      %p360 = scmp.eq.s32.totalorder %s34, 1
      %p361 = por %p359, %p360
      %p363 = scmp.ne.s32.totalorder %s348, %s362
      %p364 = scmp.eq.s32.totalorder %s34, 0
      %p365 = por %p363, %p364
      %s367 = sadd.s32 %s366, 1
      %p370 = scmp.eq.s32.totalorder %s28, 1
      %p371 = scmp.ne.s32.totalorder %s366, %s368
      %p372 = scmp.eq.s32.totalorder %s28, 0
      %p373 = por %p371, %p372
      %p374 = scmp.ne.s32.totalorder %s366, %s368
      %p375 = scmp.eq.s32.totalorder %s33, 1
      %p376 = por %p374, %p375
      %p377 = scmp.ne.s32.totalorder %s368, %s369
      %p378 = scmp.eq.s32.totalorder %s33, 0
      %p379 = por %p377, %p378
      %p380 = scmp.ne.s32.totalorder %s368, %s369
      %p381 = scmp.eq.s32.totalorder %s34, 1
      %p382 = por %p380, %p381
      %p384 = scmp.ne.s32.totalorder %s369, %s383
      %p385 = scmp.eq.s32.totalorder %s34, 0
      %p386 = por %p384, %p385
      %s388 = sadd.s32 %s387, 1
      %p391 = scmp.eq.s32.totalorder %s28, 1
      %p392 = scmp.ne.s32.totalorder %s387, %s389
      %p393 = scmp.eq.s32.totalorder %s28, 0
      %p394 = por %p392, %p393
      %p395 = scmp.ne.s32.totalorder %s387, %s389
      %p396 = scmp.eq.s32.totalorder %s33, 1
      %p397 = por %p395, %p396
      %p398 = scmp.ne.s32.totalorder %s389, %s390
      %p399 = scmp.eq.s32.totalorder %s33, 0
      %p400 = por %p398, %p399
      %p401 = scmp.ne.s32.totalorder %s389, %s390
      %p402 = scmp.eq.s32.totalorder %s34, 1
      %p403 = por %p401, %p402
      %p405 = scmp.ne.s32.totalorder %s390, %s404
      %p406 = scmp.eq.s32.totalorder %s34, 0
      %p407 = por %p405, %p406
      %s409 = sadd.s32 %s408, 1
      %p412 = scmp.eq.s32.totalorder %s28, 1
      %p413 = scmp.ne.s32.totalorder %s408, %s410
      %p414 = scmp.eq.s32.totalorder %s28, 0
      %p415 = por %p413, %p414
      %p416 = scmp.ne.s32.totalorder %s408, %s410
      %p417 = scmp.eq.s32.totalorder %s33, 1
      %p418 = por %p416, %p417
      %p419 = scmp.ne.s32.totalorder %s410, %s411
      %p420 = scmp.eq.s32.totalorder %s33, 0
      %p421 = por %p419, %p420
      %p422 = scmp.ne.s32.totalorder %s410, %s411
      %p423 = scmp.eq.s32.totalorder %s34, 1
      %p424 = por %p422, %p423
      %p426 = scmp.ne.s32.totalorder %s411, %s425
      %p427 = scmp.eq.s32.totalorder %s34, 0
      %p428 = por %p426, %p427
      %s430 = sadd.s32 %s429, 1
      %p433 = scmp.eq.s32.totalorder %s28, 1
      %p434 = scmp.ne.s32.totalorder %s429, %s431
      %p435 = scmp.eq.s32.totalorder %s28, 0
      %p436 = por %p434, %p435
      %p437 = scmp.ne.s32.totalorder %s429, %s431
      %p438 = scmp.eq.s32.totalorder %s33, 1
      %p439 = por %p437, %p438
      %p440 = scmp.ne.s32.totalorder %s431, %s432
      %p441 = scmp.eq.s32.totalorder %s33, 0
      %p442 = por %p440, %p441
      %p443 = scmp.ne.s32.totalorder %s431, %s432
      %p444 = scmp.eq.s32.totalorder %s34, 1
      %p445 = por %p443, %p444
      %p447 = scmp.ne.s32.totalorder %s432, %s446
      %p448 = scmp.eq.s32.totalorder %s34, 0
      %p449 = por %p447, %p448
      %s450 = ssub.s32 %s28, %s35
      %p451 = scmp.eq.s32.totalorder %s450, 0
      %s453 = sadd.s32 %s452, 1
      %s454 = scalar_select %p451, %s452, %s453
      %p457 = pneg %p451
      %p458 = scmp.eq.s32.totalorder %s28, 1
      %p459 = por %p457, %p458
      %p460 = scmp.ne.s32.totalorder %s452, %s455
      %p461 = scmp.eq.s32.totalorder %s28, 0
      %p462 = por %p460, %p461
      %p463 = scmp.ne.s32.totalorder %s452, %s455
      %p464 = scmp.eq.s32.totalorder %s33, 1
      %p465 = por %p463, %p464
      %p466 = scmp.ne.s32.totalorder %s455, %s456
      %p467 = scmp.eq.s32.totalorder %s33, 0
      %p468 = por %p466, %p467
      %p469 = scmp.ne.s32.totalorder %s455, %s456
      %p470 = scmp.eq.s32.totalorder %s34, 1
      %p471 = por %p469, %p470
      %p473 = scmp.ne.s32.totalorder %s456, %s472
      %p474 = scmp.eq.s32.totalorder %s34, 0
      %p475 = por %p473, %p474
      %p476 = scmp.le.s32.totalorder 1, %s28
      %p477 = scmp.lt.s32.totalorder %s28, 3
      %p478 = pnand %p476, %p477
      %p479 = pneg %p478
      // Predicated region
      $region9: #{tpu_custom_call.1} parent=5 // pred_check
        _
      $region10: #{tpu_custom_call.1} parent=5 // pred_check_branch
        %481 = sbr.rel (%p478) target = $region12
      $region11: #{tpu_custom_call.1} parent=5 // pred_region
        %s482 = ssub.s32 %s28, 1
        // Predicated region
        $region13: #{tpu_custom_call.1} parent=11 // pred_check
          %p483 = pneg %p127
        $region14: #{tpu_custom_call.1} parent=11 // pred_check_branch
          %485 = sbr.rel (%p483) target = $region16
        $region15: #{tpu_custom_call.1} parent=11 // pred_region
          _
        $region16: #{tpu_custom_call.1} parent=11 // pred_fallthru
          _
        // Predicated region
        $region17: #{tpu_custom_call.1} parent=11 // pred_check
          %p486 = pneg %p148
        $region18: #{tpu_custom_call.1} parent=11 // pred_check_branch
          %488 = sbr.rel (%p486) target = $region20
        $region19: #{tpu_custom_call.1} parent=11 // pred_region
          _
        $region20: #{tpu_custom_call.1} parent=11 // pred_fallthru
          _
        // Predicated region
        $region21: #{tpu_custom_call.1} parent=11 // pred_check
          %p489 = pneg %p169
        $region22: #{tpu_custom_call.1} parent=11 // pred_check_branch
          %491 = sbr.rel (%p489) target = $region24
        $region23: #{tpu_custom_call.1} parent=11 // pred_region
          _
        $region24: #{tpu_custom_call.1} parent=11 // pred_fallthru
          _
        // Predicated region
        $region25: #{tpu_custom_call.1} parent=11 // pred_check
          %p492 = pneg %p190
        $region26: #{tpu_custom_call.1} parent=11 // pred_check_branch
          %494 = sbr.rel (%p492) target = $region28
        $region27: #{tpu_custom_call.1} parent=11 // pred_region
          _
        $region28: #{tpu_custom_call.1} parent=11 // pred_fallthru
          _
        // Predicated region
        $region29: #{tpu_custom_call.1} parent=11 // pred_check
          %p495 = pneg %p211
        $region30: #{tpu_custom_call.1} parent=11 // pred_check_branch
          %497 = sbr.rel (%p495) target = $region32
        $region31: #{tpu_custom_call.1} parent=11 // pred_region
          _
        $region32: #{tpu_custom_call.1} parent=11 // pred_fallthru
          _
        // Predicated region
        $region33: #{tpu_custom_call.1} parent=11 // pred_check
          %p498 = pneg %p232
        $region34: #{tpu_custom_call.1} parent=11 // pred_check_branch
          %500 = sbr.rel (%p498) target = $region36
        $region35: #{tpu_custom_call.1} parent=11 // pred_region
          _
        $region36: #{tpu_custom_call.1} parent=11 // pred_fallthru
          _
        // Predicated region
        $region37: #{tpu_custom_call.1} parent=11 // pred_check
          %p501 = pneg %p253
        $region38: #{tpu_custom_call.1} parent=11 // pred_check_branch
          %503 = sbr.rel (%p501) target = $region40
        $region39: #{tpu_custom_call.1} parent=11 // pred_region
          _
        $region40: #{tpu_custom_call.1} parent=11 // pred_fallthru
          _
        // Predicated region
        $region41: #{tpu_custom_call.1} parent=11 // pred_check
          %p504 = pneg %p274
        $region42: #{tpu_custom_call.1} parent=11 // pred_check_branch
          %506 = sbr.rel (%p504) target = $region44
        $region43: #{tpu_custom_call.1} parent=11 // pred_region
          _
        $region44: #{tpu_custom_call.1} parent=11 // pred_fallthru
          _
        // Predicated region
        $region45: #{tpu_custom_call.1} parent=11 // pred_check
          %p507 = pneg %p295
        $region46: #{tpu_custom_call.1} parent=11 // pred_check_branch
          %509 = sbr.rel (%p507) target = $region48
        $region47: #{tpu_custom_call.1} parent=11 // pred_region
          _
        $region48: #{tpu_custom_call.1} parent=11 // pred_fallthru
          _
        // Predicated region
        $region49: #{tpu_custom_call.1} parent=11 // pred_check
          %p510 = pneg %p316
        $region50: #{tpu_custom_call.1} parent=11 // pred_check_branch
          %512 = sbr.rel (%p510) target = $region52
        $region51: #{tpu_custom_call.1} parent=11 // pred_region
          _
        $region52: #{tpu_custom_call.1} parent=11 // pred_fallthru
          _
        // Predicated region
        $region53: #{tpu_custom_call.1} parent=11 // pred_check
          %p513 = pneg %p337
        $region54: #{tpu_custom_call.1} parent=11 // pred_check_branch
          %515 = sbr.rel (%p513) target = $region56
        $region55: #{tpu_custom_call.1} parent=11 // pred_region
          _
        $region56: #{tpu_custom_call.1} parent=11 // pred_fallthru
          _
        // Predicated region
        $region57: #{tpu_custom_call.1} parent=11 // pred_check
          %p516 = pneg %p358
        $region58: #{tpu_custom_call.1} parent=11 // pred_check_branch
          %518 = sbr.rel (%p516) target = $region60
        $region59: #{tpu_custom_call.1} parent=11 // pred_region
          _
        $region60: #{tpu_custom_call.1} parent=11 // pred_fallthru
          _
        // Predicated region
        $region61: #{tpu_custom_call.1} parent=11 // pred_check
          %p519 = pneg %p379
        $region62: #{tpu_custom_call.1} parent=11 // pred_check_branch
          %521 = sbr.rel (%p519) target = $region64
        $region63: #{tpu_custom_call.1} parent=11 // pred_region
          _
        $region64: #{tpu_custom_call.1} parent=11 // pred_fallthru
          _
        // Predicated region
        $region65: #{tpu_custom_call.1} parent=11 // pred_check
          %p522 = pneg %p400
        $region66: #{tpu_custom_call.1} parent=11 // pred_check_branch
          %524 = sbr.rel (%p522) target = $region68
        $region67: #{tpu_custom_call.1} parent=11 // pred_region
          _
        $region68: #{tpu_custom_call.1} parent=11 // pred_fallthru
          _
        // Predicated region
        $region69: #{tpu_custom_call.1} parent=11 // pred_check
          %p525 = pneg %p421
        $region70: #{tpu_custom_call.1} parent=11 // pred_check_branch
          %527 = sbr.rel (%p525) target = $region72
        $region71: #{tpu_custom_call.1} parent=11 // pred_region
          _
        $region72: #{tpu_custom_call.1} parent=11 // pred_fallthru
          _
        // Predicated region
        $region73: #{tpu_custom_call.1} parent=11 // pred_check
          %p528 = pneg %p442
        $region74: #{tpu_custom_call.1} parent=11 // pred_check_branch
          %530 = sbr.rel (%p528) target = $region76
        $region75: #{tpu_custom_call.1} parent=11 // pred_region
          _
        $region76: #{tpu_custom_call.1} parent=11 // pred_fallthru
          _
      $region12: #{tpu_custom_call.1} parent=5 // pred_fallthru
        _
      %p531 = scmp.lt.s32.totalorder %s28, 2
      // Predicated region
      $region77: #{tpu_custom_call.1} parent=5 // pred_check
        %p532 = pneg %p531
      $region78: #{tpu_custom_call.1} parent=5 // pred_check_branch
        %534 = sbr.rel (%p532) target = $region80
      $region79: #{tpu_custom_call.1} parent=5 // pred_region
        // Predicated region
        $region81: #{tpu_custom_call.1} parent=79 // pred_check
          %p535 = pneg %p48
        $region82: #{tpu_custom_call.1} parent=79 // pred_check_branch
          %537 = sbr.rel (%p535) target = $region84
        $region83: #{tpu_custom_call.1} parent=79 // pred_region
          %s538 = smul.u32 16, %s28
          %p539 = scmp.lt.s32.totalorder %s538, 31
          %s540 = scalar_select %p539, %s538, 31
          %s541 = smul.addr %s540, 4
          %s542 = scalar_lea.vmem %s0, %s541
          %s543 = smul.u32 16, %s28
        $region84: #{tpu_custom_call.1} parent=79 // pred_fallthru
          _
        // Predicated region
        $region85: #{tpu_custom_call.1} parent=79 // pred_check
          %p544 = pneg %p74
        $region86: #{tpu_custom_call.1} parent=79 // pred_check_branch
          %546 = sbr.rel (%p544) target = $region88
        $region87: #{tpu_custom_call.1} parent=79 // pred_region
          %p547 = scmp.lt.s32.totalorder %s28, 1
          %s548 = scalar_select %p547, %s28, 1
          %s549 = scalar_lea.vmem %s1, %s548
        $region88: #{tpu_custom_call.1} parent=79 // pred_fallthru
          _
        // Predicated region
        $region89: #{tpu_custom_call.1} parent=79 // pred_check
          %p550 = pneg %p100
        $region90: #{tpu_custom_call.1} parent=79 // pred_check_branch
          %552 = sbr.rel (%p550) target = $region92
        $region91: #{tpu_custom_call.1} parent=79 // pred_region
          %p553 = scmp.lt.s32.totalorder %s28, 1
          %s554 = scalar_select %p553, %s28, 1
          %s555 = scalar_lea.vmem %s2, %s554
        $region92: #{tpu_custom_call.1} parent=79 // pred_fallthru
          _
      $region80: #{tpu_custom_call.1} parent=5 // pred_fallthru
        _
      %p556 = scmp.le.s32.totalorder 1, %s28
      %p557 = scmp.lt.s32.totalorder %s28, 3
      %p558 = pnand %p556, %p557
      %p559 = pneg %p558
      // Predicated region
      $region93: #{tpu_custom_call.1} parent=5 // pred_check
        _
      $region94: #{tpu_custom_call.1} parent=5 // pred_check_branch
        %561 = sbr.rel (%p558) target = $region96
      $region95: #{tpu_custom_call.1} parent=5 // pred_region
        %s562 = ssub.s32 %s28, 1
        %s563 = smul.u32 16, %s33
        %p564 = scmp.lt.s32.totalorder %s563, 31
        %s565 = scalar_select %p564, %s563, 31
        %s566 = smul.addr %s565, 4
        %s567 = scalar_lea.vmem %s0, %s566
        %p568 = pneg %p54
        %p569 = pneg %p51
        %p570 = scmp.lt.s32.totalorder %s33, 1
        %s571 = scalar_select %p570, %s33, 1
        %s572 = scalar_lea.vmem %s1, %s571
        %p573 = pneg %p80
        %p574 = pneg %p77
        %p575 = scmp.lt.s32.totalorder %s33, 1
        %s576 = scalar_select %p575, %s33, 1
        %s577 = scalar_lea.vmem %s2, %s576
        %p578 = pneg %p106
        %p579 = pneg %p103
        %p580 = pneg %p127
        %p581 = pneg %p124
        %p582 = pneg %p148
        %p583 = pneg %p145
        %p584 = pneg %p169
        %p585 = pneg %p166
        %p586 = pneg %p190
        %p587 = pneg %p187
        %p588 = pneg %p211
        %p589 = pneg %p208
        %p590 = pneg %p232
        %p591 = pneg %p229
        %p592 = pneg %p253
        %p593 = pneg %p250
        %p594 = pneg %p274
        %p595 = pneg %p271
        %p596 = pneg %p295
        %p597 = pneg %p292
        %p598 = pneg %p316
        %p599 = pneg %p313
        %p600 = pneg %p337
        %p601 = pneg %p334
        %p602 = pneg %p358
        %p603 = pneg %p355
        %p604 = pneg %p379
        %p605 = pneg %p376
        %p606 = pneg %p400
        %p607 = pneg %p397
        %p608 = pneg %p421
        %p609 = pneg %p418
        %p610 = pneg %p442
        %p611 = pneg %p439
        %p612 = pneg %p468
        %p613 = pneg %p465
        %s614 = sand.u32 %s455, 1
        %s615 = scalar_lea.sflag [#allocation3], %s614
        %s616 = sand.u32 %s455, 1
        %s617 = smul.addr %s616, 8
        %s618 = scalar_lea.vmem [#allocation2], %s617
        %s619 = smul.u32 16, %s33
        %p620 = scmp.lt.s32.totalorder %s619, 31
        %s621 = scalar_select %p620, %s619, 31
        %s622 = smul.addr %s621, 4
        %s623 = scalar_lea.vmem %s0, %s622
        %s624 = smul.u32 16, %s33
        %p625 = scmp.lt.s32.totalorder %s33, 1
        %s626 = scalar_select %p625, %s33, 1
        %s627 = scalar_lea.vmem %s1, %s626
        %p628 = scmp.lt.s32.totalorder %s33, 1
        %s629 = scalar_select %p628, %s33, 1
        %s630 = scalar_lea.vmem %s2, %s629
        %v632 = vld [vmem:[%s623] sm:$0xf]
        %v633 = vld [vmem:[%s623 + $0x4] sm:$0xf]
        %v634 = vld [vmem:[%s623 + $0x8] sm:$0xf]
        %v635 = vld [vmem:[%s623 + $0xc] sm:$0xf]
        %v636 = vld [vmem:[%s623 + $0x10] sm:$0xf]
        %v637 = vld [vmem:[%s623 + $0x14] sm:$0xf]
        %v638 = vld [vmem:[%s623 + $0x18] sm:$0xf]
        %v639 = vld [vmem:[%s623 + $0x1c] sm:$0xf]
        %v640 = vld [vmem:[%s623 + $0x20] sm:$0xf]
        %v641 = vld [vmem:[%s623 + $0x24] sm:$0xf]
        %v642 = vld [vmem:[%s623 + $0x28] sm:$0xf]
        %v643 = vld [vmem:[%s623 + $0x2c] sm:$0xf]
        %v644 = vld [vmem:[%s623 + $0x30] sm:$0xf]
        %v645 = vld [vmem:[%s623 + $0x34] sm:$0xf]
        %v646 = vld [vmem:[%s623 + $0x38] sm:$0xf]
        %v647 = vld [vmem:[%s623 + $0x3c] sm:$0xf]
        %v648 = vld [vmem:[%s5] sm:$0xf]
        %v649 = vld [vmem:[%s5 + $0x4] sm:$0xf]
        %v650 = vld [vmem:[%s5 + $0x8] sm:$0xf]
        %v651 = vld [vmem:[%s5 + $0xc] sm:$0xf]
        %v652 = vld [vmem:[%s6] sm:$0x1]
        %v654 = vlaneseq
        %v655 = vshrl.u32 %v654, 7
        %v656 = vsub.s32 0, %v655
        %v657 = vrot.slane %v652, %v656
        %v675 = vunpack.c.l.b16 %v632
        %v676 = vunpack.c.l.b16 %v633
        %v677 = vunpack.c.l.b16 %v634
        %v678 = vunpack.c.l.b16 %v635
        %v679 = vunpack.c.l.b16 %v636
        %v680 = vunpack.c.l.b16 %v637
        %v681 = vunpack.c.l.b16 %v638
        %v682 = vunpack.c.l.b16 %v639
        %v683 = vunpack.c.l.b16 %v640
        %v684 = vunpack.c.l.b16 %v641
        %v685 = vunpack.c.l.b16 %v642
        %v686 = vunpack.c.l.b16 %v643
        %v687 = vunpack.c.l.b16 %v644
        %v688 = vunpack.c.l.b16 %v645
        %v689 = vunpack.c.l.b16 %v646
        %v690 = vunpack.c.l.b16 %v647
        %v691 = vpack.c.b16 %v676, %v675
        %v692 = vpack.c.b16 %v678, %v677
        %v693 = vpack.c.b16 %v680, %v679
        %v694 = vpack.c.b16 %v682, %v681
        %v695 = vpack.c.b16 %v684, %v683
        %v696 = vpack.c.b16 %v686, %v685
        %v697 = vpack.c.b16 %v688, %v687
        %v698 = vpack.c.b16 %v690, %v689
        %v703 = vunpack.c.l.b16 %v648
        %v704 = vunpack.c.l.b16 %v649
        %v705 = vunpack.c.l.b16 %v650
        %v706 = vunpack.c.l.b16 %v651
        %v707 = vpack.c.b16 %v704, %v703
        %v708 = vpack.c.b16 %v706, %v705
        %vm711 = vcmask 261120
        %v713 = vsel %vm711, %v691, 0
        %v716 = vsel %vm711, %v692, 0
        %v719 = vsel %vm711, %v693, 0
        %v722 = vsel %vm711, %v694, 0
        %v725 = vsel %vm711, %v695, 0
        %v728 = vsel %vm711, %v696, 0
        %v731 = vsel %vm711, %v697, 0
        %v734 = vsel %vm711, %v698, 0
        %736 = vmatprep.subr.bf16.mxu0 0
        %737 = vmatpush1.bf16.msra.mxu0 %v707
        %738 = vmatprep.subr.bf16.mxu0 0
        %739 = vmatpush1.bf16.msra.mxu0 %v708
        %740 = vmatprep.subr.bf16.mxu0 0
        %741 = vmatpush1.bf16.msra.mxu0 0
        %742 = vmatprep.subr.bf16.mxu0 0
        %743 = vmatpush1.bf16.msra.mxu0 0
        %744 = vmatprep.subr.bf16.mxu0 0
        %745 = vmatpush1.bf16.msra.mxu0 0
        %746 = vmatprep.subr.bf16.mxu0 0
        %747 = vmatpush1.bf16.msra.mxu0 0
        %748 = vmatprep.subr.bf16.mxu0 0
        %749 = vmatpush1.bf16.msra.mxu0 0
        %750 = vmatprep.subr.bf16.mxu0 0
        %751 = vmatpush1.bf16.msra.mxu0 0
        %752 = vmatprep.subr.bf16.mxu0 0
        %753 = vmatpush1.bf16.msra.mxu0 0
        %754 = vmatprep.subr.bf16.mxu0 0
        %755 = vmatpush1.bf16.msra.mxu0 0
        %756 = vmatprep.subr.bf16.mxu0 0
        %757 = vmatpush1.bf16.msra.mxu0 0
        %758 = vmatprep.subr.bf16.mxu0 0
        %759 = vmatpush1.bf16.msra.mxu0 0
        %760 = vmatprep.subr.bf16.mxu0 0
        %761 = vmatpush1.bf16.msra.mxu0 0
        %762 = vmatprep.subr.bf16.mxu0 0
        %763 = vmatpush1.bf16.msra.mxu0 0
        %764 = vmatprep.subr.bf16.mxu0 0
        %765 = vmatpush1.bf16.msra.mxu0 0
        %766 = vmatprep.subr.bf16.mxu0 0
        %767 = vmatpush1.bf16.msra.mxu0 0
        %768 = vmatprep.mubr.bf16.mxu0 0
        %769 = vmatmul.mubr.bf16.gmra.mrb[0].mxu0 %v713
        %v770 = vpop.f32.mrb[0].mxu0
        %v771 = vadd.f32 %v657, %v770
        %v772 = vpop.f32.mrb[0].mxu0
        %v773 = vpop.f32.mrb[0].mxu0
        %v774 = vadd.f32 %v657, %v773
        %v775 = vpop.f32.mrb[0].mxu0
        %776 = vmatprep.mubr.bf16.mxu0 0
        %777 = vmatmul.mubr.bf16.gmra.mrb[0].mxu0 %v716
        %v778 = vpop.f32.mrb[0].mxu0
        %v779 = vadd.f32 %v657, %v778
        %v780 = vpop.f32.mrb[0].mxu0
        %v781 = vpop.f32.mrb[0].mxu0
        %v782 = vadd.f32 %v657, %v781
        %v783 = vpop.f32.mrb[0].mxu0
        %784 = vmatprep.mubr.bf16.mxu0 0
        %785 = vmatmul.mubr.bf16.gmra.mrb[0].mxu0 %v719
        %v786 = vpop.f32.mrb[0].mxu0
        %v787 = vadd.f32 %v657, %v786
        %v788 = vpop.f32.mrb[0].mxu0
        %v789 = vpop.f32.mrb[0].mxu0
        %v790 = vadd.f32 %v657, %v789
        %v791 = vpop.f32.mrb[0].mxu0
        %792 = vmatprep.mubr.bf16.mxu0 0
        %793 = vmatmul.mubr.bf16.gmra.mrb[0].mxu0 %v722
        %v794 = vpop.f32.mrb[0].mxu0
        %v795 = vadd.f32 %v657, %v794
        %v796 = vpop.f32.mrb[0].mxu0
        %v797 = vpop.f32.mrb[0].mxu0
        %v798 = vadd.f32 %v657, %v797
        %v799 = vpop.f32.mrb[0].mxu0
        %800 = vmatprep.mubr.bf16.mxu0 0
        %801 = vmatmul.mubr.bf16.gmra.mrb[0].mxu0 %v725
        %v802 = vpop.f32.mrb[0].mxu0
        %v803 = vadd.f32 %v657, %v802
        %v804 = vpop.f32.mrb[0].mxu0
        %v805 = vpop.f32.mrb[0].mxu0
        %v806 = vadd.f32 %v657, %v805
        %v807 = vpop.f32.mrb[0].mxu0
        %808 = vmatprep.mubr.bf16.mxu0 0
        %809 = vmatmul.mubr.bf16.gmra.mrb[0].mxu0 %v728
        %v810 = vpop.f32.mrb[0].mxu0
        %v811 = vadd.f32 %v657, %v810
        %v812 = vpop.f32.mrb[0].mxu0
        %v813 = vpop.f32.mrb[0].mxu0
        %v814 = vadd.f32 %v657, %v813
        %v815 = vpop.f32.mrb[0].mxu0
        %816 = vmatprep.mubr.bf16.mxu0 0
        %817 = vmatmul.mubr.bf16.gmra.mrb[0].mxu0 %v731
        %v818 = vpop.f32.mrb[0].mxu0
        %v819 = vadd.f32 %v657, %v818
        %v820 = vpop.f32.mrb[0].mxu0
        %v821 = vpop.f32.mrb[0].mxu0
        %v822 = vadd.f32 %v657, %v821
        %v823 = vpop.f32.mrb[0].mxu0
        %824 = vmatprep.mubr.bf16.mxu0 0
        %825 = vmatmul.mubr.bf16.gmra.mrb[0].mxu0 %v734
        %v826 = vpop.f32.mrb[0].mxu0
        %v827 = vadd.f32 %v657, %v826
        %v828 = vpop.f32.mrb[0].mxu0
        %v829 = vpop.f32.mrb[0].mxu0
        %v830 = vadd.f32 %v657, %v829
        %v831 = vpop.f32.mrb[0].mxu0
        %832 = vdwg.mxu0
        %v833 = vld [vmem:[%s7] sm:$0xf]
        %v834 = vld [vmem:[%s7 + $0x4] sm:$0xf]
        %v835 = vld [vmem:[%s7 + $0x8] sm:$0xf]
        %v836 = vld [vmem:[%s7 + $0xc] sm:$0xf]
        %v837 = vld [vmem:[%s8] sm:$0x1]
        %v839 = vlaneseq
        %v840 = vshrl.u32 %v839, 7
        %v841 = vsub.s32 0, %v840
        %v842 = vrot.slane %v837, %v841
        %v848 = vunpack.c.l.b16 %v833
        %v849 = vunpack.c.l.b16 %v834
        %v850 = vunpack.c.l.b16 %v835
        %v851 = vunpack.c.l.b16 %v836
        %v852 = vpack.c.b16 %v849, %v848
        %v853 = vpack.c.b16 %v851, %v850
        %856 = vmatprep.subr.bf16.mxu0 0
        %857 = vmatpush1.bf16.msra.mxu0 %v852
        %858 = vmatprep.subr.bf16.mxu0 0
        %859 = vmatpush1.bf16.msra.mxu0 %v853
        %860 = vmatprep.subr.bf16.mxu0 0
        %861 = vmatpush1.bf16.msra.mxu0 0
        %862 = vmatprep.subr.bf16.mxu0 0
        %863 = vmatpush1.bf16.msra.mxu0 0
        %864 = vmatprep.subr.bf16.mxu0 0
        %865 = vmatpush1.bf16.msra.mxu0 0
        %866 = vmatprep.subr.bf16.mxu0 0
        %867 = vmatpush1.bf16.msra.mxu0 0
        %868 = vmatprep.subr.bf16.mxu0 0
        %869 = vmatpush1.bf16.msra.mxu0 0
        %870 = vmatprep.subr.bf16.mxu0 0
        %871 = vmatpush1.bf16.msra.mxu0 0
        %872 = vmatprep.subr.bf16.mxu0 0
        %873 = vmatpush1.bf16.msra.mxu0 0
        %874 = vmatprep.subr.bf16.mxu0 0
        %875 = vmatpush1.bf16.msra.mxu0 0
        %876 = vmatprep.subr.bf16.mxu0 0
        %877 = vmatpush1.bf16.msra.mxu0 0
        %878 = vmatprep.subr.bf16.mxu0 0
        %879 = vmatpush1.bf16.msra.mxu0 0
        %880 = vmatprep.subr.bf16.mxu0 0
        %881 = vmatpush1.bf16.msra.mxu0 0
        %882 = vmatprep.subr.bf16.mxu0 0
        %883 = vmatpush1.bf16.msra.mxu0 0
        %884 = vmatprep.subr.bf16.mxu0 0
        %885 = vmatpush1.bf16.msra.mxu0 0
        %886 = vmatprep.subr.bf16.mxu0 0
        %887 = vmatpush1.bf16.msra.mxu0 0
        %888 = vmatprep.mubr.bf16.mxu0 0
        %889 = vmatmul.mubr.bf16.gmra.mrb[0].mxu0 %v713
        %v890 = vpop.f32.mrb[0].mxu0
        %v891 = vadd.f32 %v842, %v890
        %v892 = vpop.f32.mrb[0].mxu0
        %v893 = vpop.f32.mrb[0].mxu0
        %v894 = vadd.f32 %v842, %v893
        %v895 = vpop.f32.mrb[0].mxu0
        %896 = vmatprep.mubr.bf16.mxu0 0
        %897 = vmatmul.mubr.bf16.gmra.mrb[0].mxu0 %v716
        %v898 = vpop.f32.mrb[0].mxu0
        %v899 = vadd.f32 %v842, %v898
        %v900 = vpop.f32.mrb[0].mxu0
        %v901 = vpop.f32.mrb[0].mxu0
        %v902 = vadd.f32 %v842, %v901
        %v903 = vpop.f32.mrb[0].mxu0
        %904 = vmatprep.mubr.bf16.mxu0 0
        %905 = vmatmul.mubr.bf16.gmra.mrb[0].mxu0 %v719
        %v906 = vpop.f32.mrb[0].mxu0
        %v907 = vadd.f32 %v842, %v906
        %v908 = vpop.f32.mrb[0].mxu0
        %v909 = vpop.f32.mrb[0].mxu0
        %v910 = vadd.f32 %v842, %v909
        %v911 = vpop.f32.mrb[0].mxu0
        %912 = vmatprep.mubr.bf16.mxu0 0
        %913 = vmatmul.mubr.bf16.gmra.mrb[0].mxu0 %v722
        %v914 = vpop.f32.mrb[0].mxu0
        %v915 = vadd.f32 %v842, %v914
        %v916 = vpop.f32.mrb[0].mxu0
        %v917 = vpop.f32.mrb[0].mxu0
        %v918 = vadd.f32 %v842, %v917
        %v919 = vpop.f32.mrb[0].mxu0
        %920 = vmatprep.mubr.bf16.mxu0 0
        %921 = vmatmul.mubr.bf16.gmra.mrb[0].mxu0 %v725
        %v922 = vpop.f32.mrb[0].mxu0
        %v923 = vadd.f32 %v842, %v922
        %v924 = vpop.f32.mrb[0].mxu0
        %v925 = vpop.f32.mrb[0].mxu0
        %v926 = vadd.f32 %v842, %v925
        %v927 = vpop.f32.mrb[0].mxu0
        %928 = vmatprep.mubr.bf16.mxu0 0
        %929 = vmatmul.mubr.bf16.gmra.mrb[0].mxu0 %v728
        %v930 = vpop.f32.mrb[0].mxu0
        %v931 = vadd.f32 %v842, %v930
        %v932 = vpop.f32.mrb[0].mxu0
        %v933 = vpop.f32.mrb[0].mxu0
        %v934 = vadd.f32 %v842, %v933
        %v935 = vpop.f32.mrb[0].mxu0
        %936 = vmatprep.mubr.bf16.mxu0 0
        %937 = vmatmul.mubr.bf16.gmra.mrb[0].mxu0 %v731
        %v938 = vpop.f32.mrb[0].mxu0
        %v939 = vadd.f32 %v842, %v938
        %v940 = vpop.f32.mrb[0].mxu0
        %v941 = vpop.f32.mrb[0].mxu0
        %v942 = vadd.f32 %v842, %v941
        %v943 = vpop.f32.mrb[0].mxu0
        %944 = vmatprep.mubr.bf16.mxu0 0
        %945 = vmatmul.mubr.bf16.gmra.mrb[0].mxu0 %v734
        %v946 = vpop.f32.mrb[0].mxu0
        %v947 = vadd.f32 %v842, %v946
        %v948 = vpop.f32.mrb[0].mxu0
        %v949 = vpop.f32.mrb[0].mxu0
        %v950 = vadd.f32 %v842, %v949
        %v951 = vpop.f32.mrb[0].mxu0
        %952 = vdwg.mxu0
        %v953 = vpack.c.bf16 %v774, %v771
        %v954 = vpack.c.bf16 %v782, %v779
        %v955 = vpack.c.bf16 %v790, %v787
        %v956 = vpack.c.bf16 %v798, %v795
        %v957 = vpack.c.bf16 %v806, %v803
        %v958 = vpack.c.bf16 %v814, %v811
        %v959 = vpack.c.bf16 %v822, %v819
        %v960 = vpack.c.bf16 %v830, %v827
        %v961 = vpack.c.bf16 %v894, %v891
        %v962 = vpack.c.bf16 %v902, %v899
        %v963 = vpack.c.bf16 %v910, %v907
        %v964 = vpack.c.bf16 %v918, %v915
        %v965 = vpack.c.bf16 %v926, %v923
        %v966 = vpack.c.bf16 %v934, %v931
        %v967 = vpack.c.bf16 %v942, %v939
        %v968 = vpack.c.bf16 %v950, %v947
        %v969 = vld [vmem:[%s3] sm:$0xff]
        %v970 = vmul.f32 %v969, 0.35355338
        %v971 = vpack.c.bf16 %v970, %v970
        %v972 = vld [vmem:[%s9] sm:$0xf]
        %v973 = vld [vmem:[%s9 + $0x4] sm:$0xf]
        %v974 = vld [vmem:[%s9 + $0x8] sm:$0xf]
        %v975 = vld [vmem:[%s9 + $0xc] sm:$0xf]
        %v976 = vld [vmem:[%s627] sm:$0x1]
        %vm977 = vcmp.gt.f32.partialorder %v976, 0.0
        %v978 = vsel %vm977, 0.0, -1e+09
        %v979 = vld [vmem:[%s630] sm:$0x1]
        %v980 = vmul.f32 %v979, %v976
        %vm981 = vcmask 1040384
        %v982 = vsel %vm981, %v980, 0.0
        %983 = vadd.xlane.f32.xlu0 %v982
        %v984 = vpop.xlane.xlu0 %983
        %v985 = vadd.f32 %v984, 1e-09
        %v986 = vrcp.pop %v985
        %v987 = vmul.f32 %v980, %v986
        %v988 = vmul.f32 %v987, 0.5
        %v990 = vlaneseq
        %v991 = vshrl.u32 %v990, 7
        %v992 = vsub.s32 0, %v991
        %v993 = vrot.slane %v978, %v992
        %vm995 = vcmask 64512
        %v997 = vsel %vm995, %v971, 0
        %v1000 = vsel %vm995, %v953, 0
        %v1003 = vsel %vm995, %v954, 0
        %v1006 = vsel %vm995, %v955, 0
        %v1009 = vsel %vm995, %v956, 0
        %v1012 = vsel %vm995, %v957, 0
        %v1015 = vsel %vm995, %v958, 0
        %v1018 = vsel %vm995, %v959, 0
        %v1021 = vsel %vm995, %v960, 0
        %1023 = vmatprep.subr.bf16.mxu0 0
        %1024 = vmatpush1.bf16.xpose.msra.mxu0 %v1000
        %1025 = vmatprep.subr.bf16.mxu0 0
        %1026 = vmatpush1.bf16.xpose.msra.mxu0 %v1003
        %1027 = vmatprep.subr.bf16.mxu0 0
        %1028 = vmatpush1.bf16.xpose.msra.mxu0 %v1006
        %1029 = vmatprep.subr.bf16.mxu0 0
        %1030 = vmatpush1.bf16.xpose.msra.mxu0 %v1009
        %1031 = vmatprep.subr.bf16.mxu0 0
        %1032 = vmatpush1.bf16.xpose.msra.mxu0 %v1012
        %1033 = vmatprep.subr.bf16.mxu0 0
        %1034 = vmatpush1.bf16.xpose.msra.mxu0 %v1015
        %1035 = vmatprep.subr.bf16.mxu0 0
        %1036 = vmatpush1.bf16.xpose.msra.mxu0 %v1018
        %1037 = vmatprep.subr.bf16.mxu0 0
        %1038 = vmatpush1.bf16.xpose.msra.mxu0 %v1021
        %1039 = vmatprep.subr.bf16.mxu0 0
        %1040 = vmatpush1.bf16.xpose.msra.mxu0 0
        %1041 = vmatprep.subr.bf16.mxu0 0
        %1042 = vmatpush1.bf16.xpose.msra.mxu0 0
        %1043 = vmatprep.subr.bf16.mxu0 0
        %1044 = vmatpush1.bf16.xpose.msra.mxu0 0
        %1045 = vmatprep.subr.bf16.mxu0 0
        %1046 = vmatpush1.bf16.xpose.msra.mxu0 0
        %1047 = vmatprep.subr.bf16.mxu0 0
        %1048 = vmatpush1.bf16.xpose.msra.mxu0 0
        %1049 = vmatprep.subr.bf16.mxu0 0
        %1050 = vmatpush1.bf16.xpose.msra.mxu0 0
        %1051 = vmatprep.subr.bf16.mxu0 0
        %1052 = vmatpush1.bf16.xpose.msra.mxu0 0
        %1053 = vmatprep.subr.bf16.mxu0 0
        %1054 = vmatpush1.bf16.xpose.msra.mxu0 0
        %1055 = vmatprep.mubr.bf16.mxu0 0
        %1056 = vmatmul.mubr.bf16.gmra.mrb[0].mxu0 %v997
        %v1057 = vpop.f32.mrb[0].mxu0
        %v1058 = vadd.f32 %v993, %v1057
        %v1059 = vpop.f32.mrb[0].mxu0
        %v1060 = vpop.f32.mrb[0].mxu0
        %v1061 = vpop.f32.mrb[0].mxu0
        %1062 = vdwg.mxu0
        %1063 = vmax.xlane.f32.xlu0 %v1058
        %v1064 = vpop.xlane.xlu0 %1063
        %v1065 = vsub.f32 %v1058, %v1064
        %v1066 = vmul.f32 %v1065, 1.442695
        %v1067 = vpow.pop %v1066
        %1068 = vadd.xlane.f32.xlu0 %v1067
        %v1069 = vpop.xlane.xlu0 %1068
        %v1070 = vrcp.pop %v1069
        %v1071 = vmul.f32 %v1067, %v1070
        %v1072 = vmul.f32 %v1071, 0.5
        %v1074 = vlaneseq
        %v1075 = vshrl.u32 %v1074, 7
        %v1076 = vsub.s32 0, %v1075
        %v1077 = vrot.slane %v988, %v1076
        %v1079 = vadd.f32 %v1072, %v1077
        %1080 = vadd.xlane.f32.xlu0 %v1079
        %v1081 = vpop.xlane.xlu0 %1080
        %v1082 = vadd.f32 %v1081, 1e-09
        %v1083 = vrcp.pop %v1082
        %v1084 = vmul.f32 %v1079, %v1083
        %v1085 = vpack.c.bf16 %v1084, %v1084
        %1086 = vmatprep.subr.bf16.mxu0 0
        %1087 = vmatpush1.bf16.msra.mxu0 %v961
        %1088 = vmatprep.subr.bf16.mxu0 0
        %1089 = vmatpush1.bf16.msra.mxu0 %v962
        %1090 = vmatprep.subr.bf16.mxu0 0
        %1091 = vmatpush1.bf16.msra.mxu0 %v963
        %1092 = vmatprep.subr.bf16.mxu0 0
        %1093 = vmatpush1.bf16.msra.mxu0 %v964
        %1094 = vmatprep.subr.bf16.mxu0 0
        %1095 = vmatpush1.bf16.msra.mxu0 %v965
        %1096 = vmatprep.subr.bf16.mxu0 0
        %1097 = vmatpush1.bf16.msra.mxu0 %v966
        %1098 = vmatprep.subr.bf16.mxu0 0
        %1099 = vmatpush1.bf16.msra.mxu0 %v967
        %1100 = vmatprep.subr.bf16.mxu0 0
        %1101 = vmatpush1.bf16.msra.mxu0 %v968
        %1102 = vmatprep.subr.bf16.mxu0 0
        %1103 = vmatpush1.bf16.msra.mxu0 0
        %1104 = vmatprep.subr.bf16.mxu0 0
        %1105 = vmatpush1.bf16.msra.mxu0 0
        %1106 = vmatprep.subr.bf16.mxu0 0
        %1107 = vmatpush1.bf16.msra.mxu0 0
        %1108 = vmatprep.subr.bf16.mxu0 0
        %1109 = vmatpush1.bf16.msra.mxu0 0
        %1110 = vmatprep.subr.bf16.mxu0 0
        %1111 = vmatpush1.bf16.msra.mxu0 0
        %1112 = vmatprep.subr.bf16.mxu0 0
        %1113 = vmatpush1.bf16.msra.mxu0 0
        %1114 = vmatprep.subr.bf16.mxu0 0
        %1115 = vmatpush1.bf16.msra.mxu0 0
        %1116 = vmatprep.subr.bf16.mxu0 0
        %1117 = vmatpush1.bf16.msra.mxu0 0
        %1118 = vmatprep.mubr.bf16.mxu0 0
        %1119 = vmatmul.mubr.bf16.gmra.mrb[0].mxu0 %v1085
        %v1120 = vpop.f32.mrb[0].mxu0
        %v1121 = vadd.f32 0.0, %v1120
        %v1122 = vpop.f32.mrb[0].mxu0
        %v1123 = vpop.f32.mrb[0].mxu0
        %v1124 = vpop.f32.mrb[0].mxu0
        %1125 = vdwg.mxu0
        %v1126 = vpack.c.bf16 %v1121, %v1121
        %1128 = vrot.lane.b32.xlu0 %v971, 120
        %v1129 = vpop.permute.xlu0 %1128
        %1138 = vrot.lane.b32.xlu0 %v953, 120
        %v1139 = vpop.permute.xlu0 %1138
        %1140 = vrot.lane.b32.xlu0 %v954, 120
        %v1141 = vpop.permute.xlu0 %1140
        %1142 = vrot.lane.b32.xlu0 %v955, 120
        %v1143 = vpop.permute.xlu0 %1142
        %1144 = vrot.lane.b32.xlu0 %v956, 120
        %v1145 = vpop.permute.xlu0 %1144
        %1146 = vrot.lane.b32.xlu0 %v957, 120
        %v1147 = vpop.permute.xlu0 %1146
        %1148 = vrot.lane.b32.xlu0 %v958, 120
        %v1149 = vpop.permute.xlu0 %1148
        %1150 = vrot.lane.b32.xlu0 %v959, 120
        %v1151 = vpop.permute.xlu0 %1150
        %1152 = vrot.lane.b32.xlu0 %v960, 120
        %v1153 = vpop.permute.xlu0 %1152
        %v1155 = vsel %vm995, %v1129, 0
        %v1158 = vsel %vm995, %v1139, 0
        %v1161 = vsel %vm995, %v1141, 0
        %v1164 = vsel %vm995, %v1143, 0
        %v1167 = vsel %vm995, %v1145, 0
        %v1170 = vsel %vm995, %v1147, 0
        %v1173 = vsel %vm995, %v1149, 0
        %v1176 = vsel %vm995, %v1151, 0
        %v1179 = vsel %vm995, %v1153, 0
        %1181 = vmatprep.subr.bf16.mxu0 0
        %1182 = vmatpush1.bf16.xpose.msra.mxu0 %v1158
        %1183 = vmatprep.subr.bf16.mxu0 0
        %1184 = vmatpush1.bf16.xpose.msra.mxu0 %v1161
        %1185 = vmatprep.subr.bf16.mxu0 0
        %1186 = vmatpush1.bf16.xpose.msra.mxu0 %v1164
        %1187 = vmatprep.subr.bf16.mxu0 0
        %1188 = vmatpush1.bf16.xpose.msra.mxu0 %v1167
        %1189 = vmatprep.subr.bf16.mxu0 0
        %1190 = vmatpush1.bf16.xpose.msra.mxu0 %v1170
        %1191 = vmatprep.subr.bf16.mxu0 0
        %1192 = vmatpush1.bf16.xpose.msra.mxu0 %v1173
        %1193 = vmatprep.subr.bf16.mxu0 0
        %1194 = vmatpush1.bf16.xpose.msra.mxu0 %v1176
        %1195 = vmatprep.subr.bf16.mxu0 0
        %1196 = vmatpush1.bf16.xpose.msra.mxu0 %v1179
        %1197 = vmatprep.subr.bf16.mxu0 0
        %1198 = vmatpush1.bf16.xpose.msra.mxu0 0
        %1199 = vmatprep.subr.bf16.mxu0 0
        %1200 = vmatpush1.bf16.xpose.msra.mxu0 0
        %1201 = vmatprep.subr.bf16.mxu0 0
        %1202 = vmatpush1.bf16.xpose.msra.mxu0 0
        %1203 = vmatprep.subr.bf16.mxu0 0
        %1204 = vmatpush1.bf16.xpose.msra.mxu0 0
        %1205 = vmatprep.subr.bf16.mxu0 0
        %1206 = vmatpush1.bf16.xpose.msra.mxu0 0
        %1207 = vmatprep.subr.bf16.mxu0 0
        %1208 = vmatpush1.bf16.xpose.msra.mxu0 0
        %1209 = vmatprep.subr.bf16.mxu0 0
        %1210 = vmatpush1.bf16.xpose.msra.mxu0 0
        %1211 = vmatprep.subr.bf16.mxu0 0
        %1212 = vmatpush1.bf16.xpose.msra.mxu0 0
        %1213 = vmatprep.mubr.bf16.mxu0 0
        %1214 = vmatmul.mubr.bf16.gmra.mrb[0].mxu0 %v1155
        %v1215 = vpop.f32.mrb[0].mxu0
        %v1216 = vadd.f32 %v993, %v1215
        %v1217 = vpop.f32.mrb[0].mxu0
        %v1218 = vpop.f32.mrb[0].mxu0
        %v1219 = vpop.f32.mrb[0].mxu0
        %1220 = vdwg.mxu0
        %1221 = vmax.xlane.f32.xlu0 %v1216
        %v1222 = vpop.xlane.xlu0 %1221
        %v1223 = vsub.f32 %v1216, %v1222
        %v1224 = vmul.f32 %v1223, 1.442695
        %v1225 = vpow.pop %v1224
        %1226 = vadd.xlane.f32.xlu0 %v1225
        %v1227 = vpop.xlane.xlu0 %1226
        %v1228 = vrcp.pop %v1227
        %v1229 = vmul.f32 %v1225, %v1228
        %v1230 = vmul.f32 %v1229, 0.5
        %v1231 = vadd.f32 %v1230, %v1077
        %1232 = vadd.xlane.f32.xlu0 %v1231
        %v1233 = vpop.xlane.xlu0 %1232
        %v1234 = vadd.f32 %v1233, 1e-09
        %v1235 = vrcp.pop %v1234
        %v1236 = vmul.f32 %v1231, %v1235
        %v1237 = vpack.c.bf16 %v1236, %v1236
        %1246 = vrot.lane.b32.xlu0 %v961, 120
        %v1247 = vpop.permute.xlu0 %1246
        %1248 = vrot.lane.b32.xlu0 %v962, 120
        %v1249 = vpop.permute.xlu0 %1248
        %1250 = vrot.lane.b32.xlu0 %v963, 120
        %v1251 = vpop.permute.xlu0 %1250
        %1252 = vrot.lane.b32.xlu0 %v964, 120
        %v1253 = vpop.permute.xlu0 %1252
        %1254 = vrot.lane.b32.xlu0 %v965, 120
        %v1255 = vpop.permute.xlu0 %1254
        %1256 = vrot.lane.b32.xlu0 %v966, 120
        %v1257 = vpop.permute.xlu0 %1256
        %1258 = vrot.lane.b32.xlu0 %v967, 120
        %v1259 = vpop.permute.xlu0 %1258
        %1260 = vrot.lane.b32.xlu0 %v968, 120
        %v1261 = vpop.permute.xlu0 %1260
        %1270 = vmatprep.subr.bf16.mxu0 0
        %1271 = vmatpush1.bf16.msra.mxu0 %v1247
        %1272 = vmatprep.subr.bf16.mxu0 0
        %1273 = vmatpush1.bf16.msra.mxu0 %v1249
        %1274 = vmatprep.subr.bf16.mxu0 0
        %1275 = vmatpush1.bf16.msra.mxu0 %v1251
        %1276 = vmatprep.subr.bf16.mxu0 0
        %1277 = vmatpush1.bf16.msra.mxu0 %v1253
        %1278 = vmatprep.subr.bf16.mxu0 0
        %1279 = vmatpush1.bf16.msra.mxu0 %v1255
        %1280 = vmatprep.subr.bf16.mxu0 0
        %1281 = vmatpush1.bf16.msra.mxu0 %v1257
        %1282 = vmatprep.subr.bf16.mxu0 0
        %1283 = vmatpush1.bf16.msra.mxu0 %v1259
        %1284 = vmatprep.subr.bf16.mxu0 0
        %1285 = vmatpush1.bf16.msra.mxu0 %v1261
        %1286 = vmatprep.subr.bf16.mxu0 0
        %1287 = vmatpush1.bf16.msra.mxu0 0
        %1288 = vmatprep.subr.bf16.mxu0 0
        %1289 = vmatpush1.bf16.msra.mxu0 0
        %1290 = vmatprep.subr.bf16.mxu0 0
        %1291 = vmatpush1.bf16.msra.mxu0 0
        %1292 = vmatprep.subr.bf16.mxu0 0
        %1293 = vmatpush1.bf16.msra.mxu0 0
        %1294 = vmatprep.subr.bf16.mxu0 0
        %1295 = vmatpush1.bf16.msra.mxu0 0
        %1296 = vmatprep.subr.bf16.mxu0 0
        %1297 = vmatpush1.bf16.msra.mxu0 0
        %1298 = vmatprep.subr.bf16.mxu0 0
        %1299 = vmatpush1.bf16.msra.mxu0 0
        %1300 = vmatprep.subr.bf16.mxu0 0
        %1301 = vmatpush1.bf16.msra.mxu0 0
        %1302 = vmatprep.mubr.bf16.mxu0 0
        %1303 = vmatmul.mubr.bf16.gmra.mrb[0].mxu0 %v1237
        %v1304 = vpop.f32.mrb[0].mxu0
        %v1305 = vadd.f32 0.0, %v1304
        %v1306 = vpop.f32.mrb[0].mxu0
        %v1307 = vpop.f32.mrb[0].mxu0
        %v1308 = vpop.f32.mrb[0].mxu0
        %1309 = vdwg.mxu0
        %v1310 = vpack.c.bf16 %v1305, %v1305
        %v1312 = vsel %vm995, %v1310, 0
        %vm1314 = vcmask 1043456
        %v1316 = vsel %vm1314, %v973, 0
        %1318 = vmatprep.subr.bf16.mxu0 0
        %1319 = vmatpush1.bf16.msra.mxu0 %v1316
        %1320 = vmatprep.subr.bf16.mxu0 0
        %1321 = vmatpush1.bf16.msra.mxu0 0
        %1322 = vmatprep.subr.bf16.mxu0 0
        %1323 = vmatpush1.bf16.msra.mxu0 0
        %1324 = vmatprep.subr.bf16.mxu0 0
        %1325 = vmatpush1.bf16.msra.mxu0 0
        %1326 = vmatprep.subr.bf16.mxu0 0
        %1327 = vmatpush1.bf16.msra.mxu0 0
        %1328 = vmatprep.subr.bf16.mxu0 0
        %1329 = vmatpush1.bf16.msra.mxu0 0
        %1330 = vmatprep.subr.bf16.mxu0 0
        %1331 = vmatpush1.bf16.msra.mxu0 0
        %1332 = vmatprep.subr.bf16.mxu0 0
        %1333 = vmatpush1.bf16.msra.mxu0 0
        %1334 = vmatprep.subr.bf16.mxu0 0
        %1335 = vmatpush1.bf16.msra.mxu0 0
        %1336 = vmatprep.subr.bf16.mxu0 0
        %1337 = vmatpush1.bf16.msra.mxu0 0
        %1338 = vmatprep.subr.bf16.mxu0 0
        %1339 = vmatpush1.bf16.msra.mxu0 0
        %1340 = vmatprep.subr.bf16.mxu0 0
        %1341 = vmatpush1.bf16.msra.mxu0 0
        %1342 = vmatprep.subr.bf16.mxu0 0
        %1343 = vmatpush1.bf16.msra.mxu0 0
        %1344 = vmatprep.subr.bf16.mxu0 0
        %1345 = vmatpush1.bf16.msra.mxu0 0
        %1346 = vmatprep.subr.bf16.mxu0 0
        %1347 = vmatpush1.bf16.msra.mxu0 0
        %1348 = vmatprep.subr.bf16.mxu0 0
        %1349 = vmatpush1.bf16.msra.mxu0 0
        %1350 = vmatprep.mubr.bf16.mxu0 0
        %1351 = vmatmul.mubr.bf16.gmra.mrb[0].mxu0 %v1312
        %v1352 = vpop.f32.mrb[0].mxu0
        %v1353 = vadd.f32 0.0, %v1352
        %v1354 = vpop.f32.mrb[0].mxu0
        %v1355 = vpop.f32.mrb[0].mxu0
        %v1356 = vpop.f32.mrb[0].mxu0
        %1357 = vdwg.mxu0
        %v1359 = vsel %vm995, %v1126, 0
        %v1362 = vsel %vm1314, %v972, 0
        %1364 = vmatprep.subr.bf16.mxu0 0
        %1365 = vmatpush1.bf16.msra.mxu0 %v1362
        %1366 = vmatprep.subr.bf16.mxu0 0
        %1367 = vmatpush1.bf16.msra.mxu0 0
        %1368 = vmatprep.subr.bf16.mxu0 0
        %1369 = vmatpush1.bf16.msra.mxu0 0
        %1370 = vmatprep.subr.bf16.mxu0 0
        %1371 = vmatpush1.bf16.msra.mxu0 0
        %1372 = vmatprep.subr.bf16.mxu0 0
        %1373 = vmatpush1.bf16.msra.mxu0 0
        %1374 = vmatprep.subr.bf16.mxu0 0
        %1375 = vmatpush1.bf16.msra.mxu0 0
        %1376 = vmatprep.subr.bf16.mxu0 0
        %1377 = vmatpush1.bf16.msra.mxu0 0
        %1378 = vmatprep.subr.bf16.mxu0 0
        %1379 = vmatpush1.bf16.msra.mxu0 0
        %1380 = vmatprep.subr.bf16.mxu0 0
        %1381 = vmatpush1.bf16.msra.mxu0 0
        %1382 = vmatprep.subr.bf16.mxu0 0
        %1383 = vmatpush1.bf16.msra.mxu0 0
        %1384 = vmatprep.subr.bf16.mxu0 0
        %1385 = vmatpush1.bf16.msra.mxu0 0
        %1386 = vmatprep.subr.bf16.mxu0 0
        %1387 = vmatpush1.bf16.msra.mxu0 0
        %1388 = vmatprep.subr.bf16.mxu0 0
        %1389 = vmatpush1.bf16.msra.mxu0 0
        %1390 = vmatprep.subr.bf16.mxu0 0
        %1391 = vmatpush1.bf16.msra.mxu0 0
        %1392 = vmatprep.subr.bf16.mxu0 0
        %1393 = vmatpush1.bf16.msra.mxu0 0
        %1394 = vmatprep.subr.bf16.mxu0 0
        %1395 = vmatpush1.bf16.msra.mxu0 0
        %1396 = vmatprep.mubr.bf16.mxu0 0
        %1397 = vmatmul.mubr.bf16.gmra.mrb[0].mxu0 %v1359
        %v1398 = vpop.f32.mrb[0].mxu0
        %v1399 = vadd.f32 %v1353, %v1398
        %v1400 = vpop.f32.mrb[0].mxu0
        %v1401 = vpop.f32.mrb[0].mxu0
        %v1402 = vpop.f32.mrb[0].mxu0
        %1403 = vdwg.mxu0
        %1404 = vrot.lane.b32.xlu0 %v971, 112
        %v1405 = vpop.permute.xlu0 %1404
        %1406 = vrot.lane.b32.xlu0 %v953, 112
        %v1407 = vpop.permute.xlu0 %1406
        %1408 = vrot.lane.b32.xlu0 %v954, 112
        %v1409 = vpop.permute.xlu0 %1408
        %1410 = vrot.lane.b32.xlu0 %v955, 112
        %v1411 = vpop.permute.xlu0 %1410
        %1412 = vrot.lane.b32.xlu0 %v956, 112
        %v1413 = vpop.permute.xlu0 %1412
        %1414 = vrot.lane.b32.xlu0 %v957, 112
        %v1415 = vpop.permute.xlu0 %1414
        %1416 = vrot.lane.b32.xlu0 %v958, 112
        %v1417 = vpop.permute.xlu0 %1416
        %1418 = vrot.lane.b32.xlu0 %v959, 112
        %v1419 = vpop.permute.xlu0 %1418
        %1420 = vrot.lane.b32.xlu0 %v960, 112
        %v1421 = vpop.permute.xlu0 %1420
        %v1423 = vsel %vm995, %v1405, 0
        %v1426 = vsel %vm995, %v1407, 0
        %v1429 = vsel %vm995, %v1409, 0
        %v1432 = vsel %vm995, %v1411, 0
        %v1435 = vsel %vm995, %v1413, 0
        %v1438 = vsel %vm995, %v1415, 0
        %v1441 = vsel %vm995, %v1417, 0
        %v1444 = vsel %vm995, %v1419, 0
        %v1447 = vsel %vm995, %v1421, 0
        %1449 = vmatprep.subr.bf16.mxu0 0
        %1450 = vmatpush1.bf16.xpose.msra.mxu0 %v1426
        %1451 = vmatprep.subr.bf16.mxu0 0
        %1452 = vmatpush1.bf16.xpose.msra.mxu0 %v1429
        %1453 = vmatprep.subr.bf16.mxu0 0
        %1454 = vmatpush1.bf16.xpose.msra.mxu0 %v1432
        %1455 = vmatprep.subr.bf16.mxu0 0
        %1456 = vmatpush1.bf16.xpose.msra.mxu0 %v1435
        %1457 = vmatprep.subr.bf16.mxu0 0
        %1458 = vmatpush1.bf16.xpose.msra.mxu0 %v1438
        %1459 = vmatprep.subr.bf16.mxu0 0
        %1460 = vmatpush1.bf16.xpose.msra.mxu0 %v1441
        %1461 = vmatprep.subr.bf16.mxu0 0
        %1462 = vmatpush1.bf16.xpose.msra.mxu0 %v1444
        %1463 = vmatprep.subr.bf16.mxu0 0
        %1464 = vmatpush1.bf16.xpose.msra.mxu0 %v1447
        %1465 = vmatprep.subr.bf16.mxu0 0
        %1466 = vmatpush1.bf16.xpose.msra.mxu0 0
        %1467 = vmatprep.subr.bf16.mxu0 0
        %1468 = vmatpush1.bf16.xpose.msra.mxu0 0
        %1469 = vmatprep.subr.bf16.mxu0 0
        %1470 = vmatpush1.bf16.xpose.msra.mxu0 0
        %1471 = vmatprep.subr.bf16.mxu0 0
        %1472 = vmatpush1.bf16.xpose.msra.mxu0 0
        %1473 = vmatprep.subr.bf16.mxu0 0
        %1474 = vmatpush1.bf16.xpose.msra.mxu0 0
        %1475 = vmatprep.subr.bf16.mxu0 0
        %1476 = vmatpush1.bf16.xpose.msra.mxu0 0
        %1477 = vmatprep.subr.bf16.mxu0 0
        %1478 = vmatpush1.bf16.xpose.msra.mxu0 0
        %1479 = vmatprep.subr.bf16.mxu0 0
        %1480 = vmatpush1.bf16.xpose.msra.mxu0 0
        %1481 = vmatprep.mubr.bf16.mxu0 0
        %1482 = vmatmul.mubr.bf16.gmra.mrb[0].mxu0 %v1423
        %v1483 = vpop.f32.mrb[0].mxu0
        %v1484 = vadd.f32 %v993, %v1483
        %v1485 = vpop.f32.mrb[0].mxu0
        %v1486 = vpop.f32.mrb[0].mxu0
        %v1487 = vpop.f32.mrb[0].mxu0
        %1488 = vdwg.mxu0
        %1489 = vmax.xlane.f32.xlu0 %v1484
        %v1490 = vpop.xlane.xlu0 %1489
        %v1491 = vsub.f32 %v1484, %v1490
        %v1492 = vmul.f32 %v1491, 1.442695
        %v1493 = vpow.pop %v1492
        %1494 = vadd.xlane.f32.xlu0 %v1493
        %v1495 = vpop.xlane.xlu0 %1494
        %v1496 = vrcp.pop %v1495
        %v1497 = vmul.f32 %v1493, %v1496
        %v1498 = vmul.f32 %v1497, 0.5
        %v1499 = vadd.f32 %v1498, %v1077
        %1500 = vadd.xlane.f32.xlu0 %v1499
        %v1501 = vpop.xlane.xlu0 %1500
        %v1502 = vadd.f32 %v1501, 1e-09
        %v1503 = vrcp.pop %v1502
        %v1504 = vmul.f32 %v1499, %v1503
        %v1505 = vpack.c.bf16 %v1504, %v1504
        %1506 = vrot.lane.b32.xlu0 %v961, 112
        %v1507 = vpop.permute.xlu0 %1506
        %1508 = vrot.lane.b32.xlu0 %v962, 112
        %v1509 = vpop.permute.xlu0 %1508
        %1510 = vrot.lane.b32.xlu0 %v963, 112
        %v1511 = vpop.permute.xlu0 %1510
        %1512 = vrot.lane.b32.xlu0 %v964, 112
        %v1513 = vpop.permute.xlu0 %1512
        %1514 = vrot.lane.b32.xlu0 %v965, 112
        %v1515 = vpop.permute.xlu0 %1514
        %1516 = vrot.lane.b32.xlu0 %v966, 112
        %v1517 = vpop.permute.xlu0 %1516
        %1518 = vrot.lane.b32.xlu0 %v967, 112
        %v1519 = vpop.permute.xlu0 %1518
        %1520 = vrot.lane.b32.xlu0 %v968, 112
        %v1521 = vpop.permute.xlu0 %1520
        %1530 = vmatprep.subr.bf16.mxu0 0
        %1531 = vmatpush1.bf16.msra.mxu0 %v1507
        %1532 = vmatprep.subr.bf16.mxu0 0
        %1533 = vmatpush1.bf16.msra.mxu0 %v1509
        %1534 = vmatprep.subr.bf16.mxu0 0
        %1535 = vmatpush1.bf16.msra.mxu0 %v1511
        %1536 = vmatprep.subr.bf16.mxu0 0
        %1537 = vmatpush1.bf16.msra.mxu0 %v1513
        %1538 = vmatprep.subr.bf16.mxu0 0
        %1539 = vmatpush1.bf16.msra.mxu0 %v1515
        %1540 = vmatprep.subr.bf16.mxu0 0
        %1541 = vmatpush1.bf16.msra.mxu0 %v1517
        %1542 = vmatprep.subr.bf16.mxu0 0
        %1543 = vmatpush1.bf16.msra.mxu0 %v1519
        %1544 = vmatprep.subr.bf16.mxu0 0
        %1545 = vmatpush1.bf16.msra.mxu0 %v1521
        %1546 = vmatprep.subr.bf16.mxu0 0
        %1547 = vmatpush1.bf16.msra.mxu0 0
        %1548 = vmatprep.subr.bf16.mxu0 0
        %1549 = vmatpush1.bf16.msra.mxu0 0
        %1550 = vmatprep.subr.bf16.mxu0 0
        %1551 = vmatpush1.bf16.msra.mxu0 0
        %1552 = vmatprep.subr.bf16.mxu0 0
        %1553 = vmatpush1.bf16.msra.mxu0 0
        %1554 = vmatprep.subr.bf16.mxu0 0
        %1555 = vmatpush1.bf16.msra.mxu0 0
        %1556 = vmatprep.subr.bf16.mxu0 0
        %1557 = vmatpush1.bf16.msra.mxu0 0
        %1558 = vmatprep.subr.bf16.mxu0 0
        %1559 = vmatpush1.bf16.msra.mxu0 0
        %1560 = vmatprep.subr.bf16.mxu0 0
        %1561 = vmatpush1.bf16.msra.mxu0 0
        %1562 = vmatprep.mubr.bf16.mxu0 0
        %1563 = vmatmul.mubr.bf16.gmra.mrb[0].mxu0 %v1505
        %v1564 = vpop.f32.mrb[0].mxu0
        %v1565 = vadd.f32 0.0, %v1564
        %v1566 = vpop.f32.mrb[0].mxu0
        %v1567 = vpop.f32.mrb[0].mxu0
        %v1568 = vpop.f32.mrb[0].mxu0
        %1569 = vdwg.mxu0
        %v1570 = vpack.c.bf16 %v1565, %v1565
        %v1572 = vsel %vm995, %v1570, 0
        %v1575 = vsel %vm1314, %v974, 0
        %1577 = vmatprep.subr.bf16.mxu0 0
        %1578 = vmatpush1.bf16.msra.mxu0 %v1575
        %1579 = vmatprep.subr.bf16.mxu0 0
        %1580 = vmatpush1.bf16.msra.mxu0 0
        %1581 = vmatprep.subr.bf16.mxu0 0
        %1582 = vmatpush1.bf16.msra.mxu0 0
        %1583 = vmatprep.subr.bf16.mxu0 0
        %1584 = vmatpush1.bf16.msra.mxu0 0
        %1585 = vmatprep.subr.bf16.mxu0 0
        %1586 = vmatpush1.bf16.msra.mxu0 0
        %1587 = vmatprep.subr.bf16.mxu0 0
        %1588 = vmatpush1.bf16.msra.mxu0 0
        %1589 = vmatprep.subr.bf16.mxu0 0
        %1590 = vmatpush1.bf16.msra.mxu0 0
        %1591 = vmatprep.subr.bf16.mxu0 0
        %1592 = vmatpush1.bf16.msra.mxu0 0
        %1593 = vmatprep.subr.bf16.mxu0 0
        %1594 = vmatpush1.bf16.msra.mxu0 0
        %1595 = vmatprep.subr.bf16.mxu0 0
        %1596 = vmatpush1.bf16.msra.mxu0 0
        %1597 = vmatprep.subr.bf16.mxu0 0
        %1598 = vmatpush1.bf16.msra.mxu0 0
        %1599 = vmatprep.subr.bf16.mxu0 0
        %1600 = vmatpush1.bf16.msra.mxu0 0
        %1601 = vmatprep.subr.bf16.mxu0 0
        %1602 = vmatpush1.bf16.msra.mxu0 0
        %1603 = vmatprep.subr.bf16.mxu0 0
        %1604 = vmatpush1.bf16.msra.mxu0 0
        %1605 = vmatprep.subr.bf16.mxu0 0
        %1606 = vmatpush1.bf16.msra.mxu0 0
        %1607 = vmatprep.subr.bf16.mxu0 0
        %1608 = vmatpush1.bf16.msra.mxu0 0
        %1609 = vmatprep.mubr.bf16.mxu0 0
        %1610 = vmatmul.mubr.bf16.gmra.mrb[0].mxu0 %v1572
        %v1611 = vpop.f32.mrb[0].mxu0
        %v1612 = vadd.f32 0.0, %v1611
        %v1613 = vpop.f32.mrb[0].mxu0
        %v1614 = vpop.f32.mrb[0].mxu0
        %v1615 = vpop.f32.mrb[0].mxu0
        %1616 = vdwg.mxu0
        %v1617 = vadd.f32 %v1399, %v1612
        %1618 = vrot.lane.b32.xlu0 %v971, 104
        %v1619 = vpop.permute.xlu0 %1618
        %1620 = vrot.lane.b32.xlu0 %v953, 104
        %v1621 = vpop.permute.xlu0 %1620
        %1622 = vrot.lane.b32.xlu0 %v954, 104
        %v1623 = vpop.permute.xlu0 %1622
        %1624 = vrot.lane.b32.xlu0 %v955, 104
        %v1625 = vpop.permute.xlu0 %1624
        %1626 = vrot.lane.b32.xlu0 %v956, 104
        %v1627 = vpop.permute.xlu0 %1626
        %1628 = vrot.lane.b32.xlu0 %v957, 104
        %v1629 = vpop.permute.xlu0 %1628
        %1630 = vrot.lane.b32.xlu0 %v958, 104
        %v1631 = vpop.permute.xlu0 %1630
        %1632 = vrot.lane.b32.xlu0 %v959, 104
        %v1633 = vpop.permute.xlu0 %1632
        %1634 = vrot.lane.b32.xlu0 %v960, 104
        %v1635 = vpop.permute.xlu0 %1634
        %v1637 = vsel %vm995, %v1619, 0
        %v1640 = vsel %vm995, %v1621, 0
        %v1643 = vsel %vm995, %v1623, 0
        %v1646 = vsel %vm995, %v1625, 0
        %v1649 = vsel %vm995, %v1627, 0
        %v1652 = vsel %vm995, %v1629, 0
        %v1655 = vsel %vm995, %v1631, 0
        %v1658 = vsel %vm995, %v1633, 0
        %v1661 = vsel %vm995, %v1635, 0
        %1663 = vmatprep.subr.bf16.mxu0 0
        %1664 = vmatpush1.bf16.xpose.msra.mxu0 %v1640
        %1665 = vmatprep.subr.bf16.mxu0 0
        %1666 = vmatpush1.bf16.xpose.msra.mxu0 %v1643
        %1667 = vmatprep.subr.bf16.mxu0 0
        %1668 = vmatpush1.bf16.xpose.msra.mxu0 %v1646
        %1669 = vmatprep.subr.bf16.mxu0 0
        %1670 = vmatpush1.bf16.xpose.msra.mxu0 %v1649
        %1671 = vmatprep.subr.bf16.mxu0 0
        %1672 = vmatpush1.bf16.xpose.msra.mxu0 %v1652
        %1673 = vmatprep.subr.bf16.mxu0 0
        %1674 = vmatpush1.bf16.xpose.msra.mxu0 %v1655
        %1675 = vmatprep.subr.bf16.mxu0 0
        %1676 = vmatpush1.bf16.xpose.msra.mxu0 %v1658
        %1677 = vmatprep.subr.bf16.mxu0 0
        %1678 = vmatpush1.bf16.xpose.msra.mxu0 %v1661
        %1679 = vmatprep.subr.bf16.mxu0 0
        %1680 = vmatpush1.bf16.xpose.msra.mxu0 0
        %1681 = vmatprep.subr.bf16.mxu0 0
        %1682 = vmatpush1.bf16.xpose.msra.mxu0 0
        %1683 = vmatprep.subr.bf16.mxu0 0
        %1684 = vmatpush1.bf16.xpose.msra.mxu0 0
        %1685 = vmatprep.subr.bf16.mxu0 0
        %1686 = vmatpush1.bf16.xpose.msra.mxu0 0
        %1687 = vmatprep.subr.bf16.mxu0 0
        %1688 = vmatpush1.bf16.xpose.msra.mxu0 0
        %1689 = vmatprep.subr.bf16.mxu0 0
        %1690 = vmatpush1.bf16.xpose.msra.mxu0 0
        %1691 = vmatprep.subr.bf16.mxu0 0
        %1692 = vmatpush1.bf16.xpose.msra.mxu0 0
        %1693 = vmatprep.subr.bf16.mxu0 0
        %1694 = vmatpush1.bf16.xpose.msra.mxu0 0
        %1695 = vmatprep.mubr.bf16.mxu0 0
        %1696 = vmatmul.mubr.bf16.gmra.mrb[0].mxu0 %v1637
        %v1697 = vpop.f32.mrb[0].mxu0
        %v1698 = vadd.f32 %v993, %v1697
        %v1699 = vpop.f32.mrb[0].mxu0
        %v1700 = vpop.f32.mrb[0].mxu0
        %v1701 = vpop.f32.mrb[0].mxu0
        %1702 = vdwg.mxu0
        %1703 = vmax.xlane.f32.xlu0 %v1698
        %v1704 = vpop.xlane.xlu0 %1703
        %v1705 = vsub.f32 %v1698, %v1704
        %v1706 = vmul.f32 %v1705, 1.442695
        %v1707 = vpow.pop %v1706
        %1708 = vadd.xlane.f32.xlu0 %v1707
        %v1709 = vpop.xlane.xlu0 %1708
        %v1710 = vrcp.pop %v1709
        %v1711 = vmul.f32 %v1707, %v1710
        %v1712 = vmul.f32 %v1711, 0.5
        %v1713 = vadd.f32 %v1712, %v1077
        %1714 = vadd.xlane.f32.xlu0 %v1713
        %v1715 = vpop.xlane.xlu0 %1714
        %v1716 = vadd.f32 %v1715, 1e-09
        %v1717 = vrcp.pop %v1716
        %v1718 = vmul.f32 %v1713, %v1717
        %v1719 = vpack.c.bf16 %v1718, %v1718
        %1720 = vrot.lane.b32.xlu0 %v961, 104
        %v1721 = vpop.permute.xlu0 %1720
        %1722 = vrot.lane.b32.xlu0 %v962, 104
        %v1723 = vpop.permute.xlu0 %1722
        %1724 = vrot.lane.b32.xlu0 %v963, 104
        %v1725 = vpop.permute.xlu0 %1724
        %1726 = vrot.lane.b32.xlu0 %v964, 104
        %v1727 = vpop.permute.xlu0 %1726
        %1728 = vrot.lane.b32.xlu0 %v965, 104
        %v1729 = vpop.permute.xlu0 %1728
        %1730 = vrot.lane.b32.xlu0 %v966, 104
        %v1731 = vpop.permute.xlu0 %1730
        %1732 = vrot.lane.b32.xlu0 %v967, 104
        %v1733 = vpop.permute.xlu0 %1732
        %1734 = vrot.lane.b32.xlu0 %v968, 104
        %v1735 = vpop.permute.xlu0 %1734
        %1744 = vmatprep.subr.bf16.mxu0 0
        %1745 = vmatpush1.bf16.msra.mxu0 %v1721
        %1746 = vmatprep.subr.bf16.mxu0 0
        %1747 = vmatpush1.bf16.msra.mxu0 %v1723
        %1748 = vmatprep.subr.bf16.mxu0 0
        %1749 = vmatpush1.bf16.msra.mxu0 %v1725
        %1750 = vmatprep.subr.bf16.mxu0 0
        %1751 = vmatpush1.bf16.msra.mxu0 %v1727
        %1752 = vmatprep.subr.bf16.mxu0 0
        %1753 = vmatpush1.bf16.msra.mxu0 %v1729
        %1754 = vmatprep.subr.bf16.mxu0 0
        %1755 = vmatpush1.bf16.msra.mxu0 %v1731
        %1756 = vmatprep.subr.bf16.mxu0 0
        %1757 = vmatpush1.bf16.msra.mxu0 %v1733
        %1758 = vmatprep.subr.bf16.mxu0 0
        %1759 = vmatpush1.bf16.msra.mxu0 %v1735
        %1760 = vmatprep.subr.bf16.mxu0 0
        %1761 = vmatpush1.bf16.msra.mxu0 0
        %1762 = vmatprep.subr.bf16.mxu0 0
        %1763 = vmatpush1.bf16.msra.mxu0 0
        %1764 = vmatprep.subr.bf16.mxu0 0
        %1765 = vmatpush1.bf16.msra.mxu0 0
        %1766 = vmatprep.subr.bf16.mxu0 0
        %1767 = vmatpush1.bf16.msra.mxu0 0
        %1768 = vmatprep.subr.bf16.mxu0 0
        %1769 = vmatpush1.bf16.msra.mxu0 0
        %1770 = vmatprep.subr.bf16.mxu0 0
        %1771 = vmatpush1.bf16.msra.mxu0 0
        %1772 = vmatprep.subr.bf16.mxu0 0
        %1773 = vmatpush1.bf16.msra.mxu0 0
        %1774 = vmatprep.subr.bf16.mxu0 0
        %1775 = vmatpush1.bf16.msra.mxu0 0
        %1776 = vmatprep.mubr.bf16.mxu0 0
        %1777 = vmatmul.mubr.bf16.gmra.mrb[0].mxu0 %v1719
        %v1778 = vpop.f32.mrb[0].mxu0
        %v1779 = vadd.f32 0.0, %v1778
        %v1780 = vpop.f32.mrb[0].mxu0
        %v1781 = vpop.f32.mrb[0].mxu0
        %v1782 = vpop.f32.mrb[0].mxu0
        %1783 = vdwg.mxu0
        %v1784 = vpack.c.bf16 %v1779, %v1779
        %v1786 = vsel %vm995, %v1784, 0
        %v1789 = vsel %vm1314, %v975, 0
        %1791 = vmatprep.subr.bf16.mxu0 0
        %1792 = vmatpush1.bf16.msra.mxu0 %v1789
        %1793 = vmatprep.subr.bf16.mxu0 0
        %1794 = vmatpush1.bf16.msra.mxu0 0
        %1795 = vmatprep.subr.bf16.mxu0 0
        %1796 = vmatpush1.bf16.msra.mxu0 0
        %1797 = vmatprep.subr.bf16.mxu0 0
        %1798 = vmatpush1.bf16.msra.mxu0 0
        %1799 = vmatprep.subr.bf16.mxu0 0
        %1800 = vmatpush1.bf16.msra.mxu0 0
        %1801 = vmatprep.subr.bf16.mxu0 0
        %1802 = vmatpush1.bf16.msra.mxu0 0
        %1803 = vmatprep.subr.bf16.mxu0 0
        %1804 = vmatpush1.bf16.msra.mxu0 0
        %1805 = vmatprep.subr.bf16.mxu0 0
        %1806 = vmatpush1.bf16.msra.mxu0 0
        %1807 = vmatprep.subr.bf16.mxu0 0
        %1808 = vmatpush1.bf16.msra.mxu0 0
        %1809 = vmatprep.subr.bf16.mxu0 0
        %1810 = vmatpush1.bf16.msra.mxu0 0
        %1811 = vmatprep.subr.bf16.mxu0 0
        %1812 = vmatpush1.bf16.msra.mxu0 0
        %1813 = vmatprep.subr.bf16.mxu0 0
        %1814 = vmatpush1.bf16.msra.mxu0 0
        %1815 = vmatprep.subr.bf16.mxu0 0
        %1816 = vmatpush1.bf16.msra.mxu0 0
        %1817 = vmatprep.subr.bf16.mxu0 0
        %1818 = vmatpush1.bf16.msra.mxu0 0
        %1819 = vmatprep.subr.bf16.mxu0 0
        %1820 = vmatpush1.bf16.msra.mxu0 0
        %1821 = vmatprep.subr.bf16.mxu0 0
        %1822 = vmatpush1.bf16.msra.mxu0 0
        %1823 = vmatprep.mubr.bf16.mxu0 0
        %1824 = vmatmul.mubr.bf16.gmra.mrb[0].mxu0 %v1786
        %v1825 = vpop.f32.mrb[0].mxu0
        %v1826 = vadd.f32 0.0, %v1825
        %v1827 = vpop.f32.mrb[0].mxu0
        %v1828 = vpop.f32.mrb[0].mxu0
        %v1829 = vpop.f32.mrb[0].mxu0
        %1830 = vdwg.mxu0
        %v1831 = vadd.f32 %v1617, %v1826
        %v1832 = vld [vmem:[%s10] sm:$0x1]
        %v1834 = vlaneseq
        %v1835 = vshrl.u32 %v1834, 7
        %v1836 = vsub.s32 0, %v1835
        %v1837 = vrot.slane %v1832, %v1836
        %v1839 = vadd.f32 %v1831, %v1837
        %v1840 = vld [vmem:[%s4] sm:$0xff]
        %v1841 = vadd.f32 %v1839, %v1840
        %v1842 = vld [vmem:[%s11] sm:$0x1]
        %v1843 = vld [vmem:[%s12] sm:$0x1]
        %v1844 = vsel %vm711, %v1841, 0.0
        %1845 = vadd.xlane.f32.xlu0 %v1844
        %v1846 = vpop.xlane.xlu0 %1845
        %v1847 = vrcp.pop 32.0
        %v1848 = vmul.f32 %v1846, %v1847
        %v1849 = vsub.f32 %v1841, %v1848
        %v1850 = vmul.f32 %v1849, %v1849
        %v1851 = vsel %vm711, %v1850, 0.0
        %1852 = vadd.xlane.f32.xlu0 %v1851
        %v1853 = vpop.xlane.xlu0 %1852
        %v1854 = vmul.f32 %v1853, %v1847
        %v1855 = vadd.f32 %v1854, 1e-05
        %v1856 = vrsqrt.pop %v1855
        %v1857 = vmul.f32 %v1849, %v1856
        %v1859 = vlaneseq
        %v1860 = vshrl.u32 %v1859, 7
        %v1861 = vsub.s32 0, %v1860
        %v1862 = vrot.slane %v1842, %v1861
        %v1864 = vmul.f32 %v1857, %v1862
        %v1866 = vlaneseq
        %v1867 = vshrl.u32 %v1866, 7
        %v1868 = vsub.s32 0, %v1867
        %v1869 = vrot.slane %v1843, %v1868
        %v1871 = vadd.f32 %v1864, %v1869
        %v1872 = vpack.c.bf16 %v1871, %v1871
        %v1873 = vld [vmem:[%s13] sm:$0xf]
        %v1874 = vld [vmem:[%s13 + $0x4] sm:$0xf]
        %v1875 = vld [vmem:[%s13 + $0x8] sm:$0xf]
        %v1876 = vld [vmem:[%s13 + $0xc] sm:$0xf]
        %v1877 = vld [vmem:[%s14] sm:$0x1]
        %v1879 = vlaneseq
        %v1880 = vshrl.u32 %v1879, 7
        %v1881 = vsub.s32 0, %v1880
        %v1882 = vrot.slane %v1877, %v1881
        %v1888 = vunpack.c.l.b16 %v1873
        %v1889 = vunpack.c.l.b16 %v1874
        %v1890 = vunpack.c.l.b16 %v1875
        %v1891 = vunpack.c.l.b16 %v1876
        %v1892 = vpack.c.b16 %v1889, %v1888
        %v1893 = vpack.c.b16 %v1891, %v1890
        %v1897 = vsel %vm711, %v1872, 0
        %1899 = vmatprep.subr.bf16.mxu0 0
        %1900 = vmatpush1.bf16.msra.mxu0 %v1892
        %1901 = vmatprep.subr.bf16.mxu0 0
        %1902 = vmatpush1.bf16.msra.mxu0 %v1893
        %1903 = vmatprep.subr.bf16.mxu0 0
        %1904 = vmatpush1.bf16.msra.mxu0 0
        %1905 = vmatprep.subr.bf16.mxu0 0
        %1906 = vmatpush1.bf16.msra.mxu0 0
        %1907 = vmatprep.subr.bf16.mxu0 0
        %1908 = vmatpush1.bf16.msra.mxu0 0
        %1909 = vmatprep.subr.bf16.mxu0 0
        %1910 = vmatpush1.bf16.msra.mxu0 0
        %1911 = vmatprep.subr.bf16.mxu0 0
        %1912 = vmatpush1.bf16.msra.mxu0 0
        %1913 = vmatprep.subr.bf16.mxu0 0
        %1914 = vmatpush1.bf16.msra.mxu0 0
        %1915 = vmatprep.subr.bf16.mxu0 0
        %1916 = vmatpush1.bf16.msra.mxu0 0
        %1917 = vmatprep.subr.bf16.mxu0 0
        %1918 = vmatpush1.bf16.msra.mxu0 0
        %1919 = vmatprep.subr.bf16.mxu0 0
        %1920 = vmatpush1.bf16.msra.mxu0 0
        %1921 = vmatprep.subr.bf16.mxu0 0
        %1922 = vmatpush1.bf16.msra.mxu0 0
        %1923 = vmatprep.subr.bf16.mxu0 0
        %1924 = vmatpush1.bf16.msra.mxu0 0
        %1925 = vmatprep.subr.bf16.mxu0 0
        %1926 = vmatpush1.bf16.msra.mxu0 0
        %1927 = vmatprep.subr.bf16.mxu0 0
        %1928 = vmatpush1.bf16.msra.mxu0 0
        %1929 = vmatprep.subr.bf16.mxu0 0
        %1930 = vmatpush1.bf16.msra.mxu0 0
        %1931 = vmatprep.mubr.bf16.mxu0 0
        %1932 = vmatmul.mubr.bf16.gmra.mrb[0].mxu0 %v1897
        %v1933 = vpop.f32.mrb[0].mxu0
        %v1934 = vadd.f32 %v1882, %v1933
        %v1935 = vpop.f32.mrb[0].mxu0
        %v1936 = vpop.f32.mrb[0].mxu0
        %v1937 = vpop.f32.mrb[0].mxu0
        %1938 = vdwg.mxu0
        %v1939 = vmax.f32 %v1934, 0.0
        %v1940 = vpack.c.bf16 %v1939, %v1939
        %v1941 = vld [vmem:[%s15] sm:$0xf]
        %v1942 = vld [vmem:[%s15 + $0x4] sm:$0xf]
        %v1943 = vld [vmem:[%s15 + $0x8] sm:$0xf]
        %v1944 = vld [vmem:[%s15 + $0xc] sm:$0xf]
        %v1945 = vld [vmem:[%s15 + $0x10] sm:$0xf]
        %v1946 = vld [vmem:[%s15 + $0x14] sm:$0xf]
        %v1947 = vld [vmem:[%s15 + $0x18] sm:$0xf]
        %v1948 = vld [vmem:[%s15 + $0x1c] sm:$0xf]
        %v1949 = vld [vmem:[%s15 + $0x20] sm:$0xf]
        %v1950 = vld [vmem:[%s15 + $0x24] sm:$0xf]
        %v1951 = vld [vmem:[%s15 + $0x28] sm:$0xf]
        %v1952 = vld [vmem:[%s15 + $0x2c] sm:$0xf]
        %v1953 = vld [vmem:[%s15 + $0x30] sm:$0xf]
        %v1954 = vld [vmem:[%s15 + $0x34] sm:$0xf]
        %v1955 = vld [vmem:[%s15 + $0x38] sm:$0xf]
        %v1956 = vld [vmem:[%s15 + $0x3c] sm:$0xf]
        %v1957 = vld [vmem:[%s16] sm:$0x1]
        %v1959 = vlaneseq
        %v1960 = vshrl.u32 %v1959, 7
        %v1961 = vsub.s32 0, %v1960
        %v1962 = vrot.slane %v1957, %v1961
        %v1980 = vunpack.c.l.b16 %v1941
        %v1981 = vunpack.c.l.b16 %v1942
        %v1982 = vunpack.c.l.b16 %v1943
        %v1983 = vunpack.c.l.b16 %v1944
        %v1984 = vunpack.c.l.b16 %v1945
        %v1985 = vunpack.c.l.b16 %v1946
        %v1986 = vunpack.c.l.b16 %v1947
        %v1987 = vunpack.c.l.b16 %v1948
        %v1988 = vunpack.c.l.b16 %v1949
        %v1989 = vunpack.c.l.b16 %v1950
        %v1990 = vunpack.c.l.b16 %v1951
        %v1991 = vunpack.c.l.b16 %v1952
        %v1992 = vunpack.c.l.b16 %v1953
        %v1993 = vunpack.c.l.b16 %v1954
        %v1994 = vunpack.c.l.b16 %v1955
        %v1995 = vunpack.c.l.b16 %v1956
        %v1996 = vpack.c.b16 %v1981, %v1980
        %v1997 = vpack.c.b16 %v1983, %v1982
        %v1998 = vpack.c.b16 %v1985, %v1984
        %v1999 = vpack.c.b16 %v1987, %v1986
        %v2000 = vpack.c.b16 %v1989, %v1988
        %v2001 = vpack.c.b16 %v1991, %v1990
        %v2002 = vpack.c.b16 %v1993, %v1992
        %v2003 = vpack.c.b16 %v1995, %v1994
        %2012 = vmatprep.subr.bf16.mxu0 0
        %2013 = vmatpush1.bf16.msra.mxu0 %v1996
        %2014 = vmatprep.subr.bf16.mxu0 0
        %2015 = vmatpush1.bf16.msra.mxu0 %v1997
        %2016 = vmatprep.subr.bf16.mxu0 0
        %2017 = vmatpush1.bf16.msra.mxu0 %v1998
        %2018 = vmatprep.subr.bf16.mxu0 0
        %2019 = vmatpush1.bf16.msra.mxu0 %v1999
        %2020 = vmatprep.subr.bf16.mxu0 0
        %2021 = vmatpush1.bf16.msra.mxu0 %v2000
        %2022 = vmatprep.subr.bf16.mxu0 0
        %2023 = vmatpush1.bf16.msra.mxu0 %v2001
        %2024 = vmatprep.subr.bf16.mxu0 0
        %2025 = vmatpush1.bf16.msra.mxu0 %v2002
        %2026 = vmatprep.subr.bf16.mxu0 0
        %2027 = vmatpush1.bf16.msra.mxu0 %v2003
        %2028 = vmatprep.subr.bf16.mxu0 0
        %2029 = vmatpush1.bf16.msra.mxu0 0
        %2030 = vmatprep.subr.bf16.mxu0 0
        %2031 = vmatpush1.bf16.msra.mxu0 0
        %2032 = vmatprep.subr.bf16.mxu0 0
        %2033 = vmatpush1.bf16.msra.mxu0 0
        %2034 = vmatprep.subr.bf16.mxu0 0
        %2035 = vmatpush1.bf16.msra.mxu0 0
        %2036 = vmatprep.subr.bf16.mxu0 0
        %2037 = vmatpush1.bf16.msra.mxu0 0
        %2038 = vmatprep.subr.bf16.mxu0 0
        %2039 = vmatpush1.bf16.msra.mxu0 0
        %2040 = vmatprep.subr.bf16.mxu0 0
        %2041 = vmatpush1.bf16.msra.mxu0 0
        %2042 = vmatprep.subr.bf16.mxu0 0
        %2043 = vmatpush1.bf16.msra.mxu0 0
        %2044 = vmatprep.mubr.bf16.mxu0 0
        %2045 = vmatmul.mubr.bf16.gmra.mrb[0].mxu0 %v1940
        %v2046 = vpop.f32.mrb[0].mxu0
        %v2047 = vadd.f32 %v1962, %v2046
        %v2048 = vpop.f32.mrb[0].mxu0
        %v2049 = vpop.f32.mrb[0].mxu0
        %v2050 = vpop.f32.mrb[0].mxu0
        %2051 = vdwg.mxu0
        %v2052 = vadd.f32 %v1871, %v2047
        %v2053 = vld [vmem:[%s17] sm:$0x1]
        %v2054 = vld [vmem:[%s18] sm:$0x1]
        %v2055 = vsel %vm711, %v2052, 0.0
        %2056 = vadd.xlane.f32.xlu0 %v2055
        %v2057 = vpop.xlane.xlu0 %2056
        %v2058 = vmul.f32 %v2057, %v1847
        %v2059 = vsub.f32 %v2052, %v2058
        %v2060 = vmul.f32 %v2059, %v2059
        %v2061 = vsel %vm711, %v2060, 0.0
        %2062 = vadd.xlane.f32.xlu0 %v2061
        %v2063 = vpop.xlane.xlu0 %2062
        %v2064 = vmul.f32 %v2063, %v1847
        %v2065 = vadd.f32 %v2064, 1e-05
        %v2066 = vrsqrt.pop %v2065
        %v2067 = vmul.f32 %v2059, %v2066
        %v2069 = vlaneseq
        %v2070 = vshrl.u32 %v2069, 7
        %v2071 = vsub.s32 0, %v2070
        %v2072 = vrot.slane %v2053, %v2071
        %v2074 = vmul.f32 %v2067, %v2072
        %v2076 = vlaneseq
        %v2077 = vshrl.u32 %v2076, 7
        %v2078 = vsub.s32 0, %v2077
        %v2079 = vrot.slane %v2054, %v2078
        %v2081 = vadd.f32 %v2074, %v2079
        %2082 = vst.msk [vmem:[%s618] sm:$0xff] %vm711, %v2081
        %s2083 = sand.u32 %s455, 1
        %s2084 = scalar_lea.sflag [#allocation3], %s2083
        %s2085 = sand.u32 %s455, 1
        %s2086 = smul.addr %s2085, 8
        %s2087 = scalar_lea.vmem [#allocation2], %s2086
        // Predicated region
        $region97: #{tpu_custom_call.1} parent=95 // pred_check
          %p2088 = pneg %p465
        $region98: #{tpu_custom_call.1} parent=95 // pred_check_branch
          %2090 = sbr.rel (%p2088) target = $region100
        $region99: #{tpu_custom_call.1} parent=95 // pred_region
          %s2092 = ssub.s32 128, 128
          %2093 = vsyncadd %s2084, %s2092
          %s2094 = smul.addr %s33, 128
          %s2095 = scalar_lea.hbm %s19, %s2094
          %s2097 = sshll.u32 %s2087, 4
          %s2098 = int_to_ptr.vmem [resolvable:$true] %s2097
          %2100 = dma.vmem_to_hbm [thread:$0]  %s2098, 128, %s2095, %s2084
        $region100: #{tpu_custom_call.1} parent=95 // pred_fallthru
          _
      $region96: #{tpu_custom_call.1} parent=5 // pred_fallthru
        _
      %p2101 = scmp.le.s32.totalorder 2, %s28
      // Predicated region
      $region101: #{tpu_custom_call.1} parent=5 // pred_check
        %p2102 = pneg %p2101
      $region102: #{tpu_custom_call.1} parent=5 // pred_check_branch
        %2104 = sbr.rel (%p2102) target = $region104
      $region103: #{tpu_custom_call.1} parent=5 // pred_region
        %s2105 = ssub.s32 %s28, 2
        // Predicated region
        $region105: #{tpu_custom_call.1} parent=103 // pred_check
          %p2106 = pneg %p471
        $region106: #{tpu_custom_call.1} parent=103 // pred_check_branch
          %2108 = sbr.rel (%p2106) target = $region108
        $region107: #{tpu_custom_call.1} parent=103 // pred_region
          %s2109 = sand.u32 %s456, 1
          %s2110 = scalar_lea.sflag [#allocation3], %s2109
          %s2111 = sand.u32 %s456, 1
          %s2112 = smul.addr %s2111, 8
          %s2113 = scalar_lea.vmem [#allocation2], %s2112
          %2114 = dma.done %s2110, 128
        $region108: #{tpu_custom_call.1} parent=103 // pred_fallthru
          _
      $region104: #{tpu_custom_call.1} parent=5 // pred_fallthru
        _
    $region6: #{tpu_custom_call.1} parent=1 // loop_footer
      %s32 = sadd.s32 1, %s28
    $region7: #{tpu_custom_call.1} parent=1 // loop_footer_branch
      %27 = sbr.rel target = $region3
    $region8: #{tpu_custom_call.1} parent=1 // loop_exit
      _
    %2115 = vsyncpa [#allocation3], 1
    %s2116 = scalar_lea.sflag [#allocation3], 1
    %2117 = vsyncpa %s2116, 1

</llo_original>
